<compile_context>
chip_gen: v7x
topology: tpu7x:2x2x1
jax: 0.10.0
libtpu: 0.0.40
codegen_flags: <defaults>
</compile_context>

<pallas_src>
import functools

import numpy as np

import jax
import jax.numpy as jnp
from jax.experimental import pallas as pl
from jax.experimental.pallas import tpu as pltpu


# --------------------------------------------------------------------------
# Helpers shared by the kernel and the reference (identical f32 freq bits)
# --------------------------------------------------------------------------
def _round_up(a, m):
    return (a + m - 1) // m * m


def _pe_freqs(pe_dim, pe_sigma):
    # exp(linspace(0, log(sigma), pe_dim//2)), rounded once to f32.
    return np.exp(np.linspace(0.0, np.log(pe_sigma), pe_dim // 2)).astype(np.float32)


# --------------------------------------------------------------------------
# Kernel
# --------------------------------------------------------------------------
def _make_hypo_mlp_kernel(depth, in_dim, use_pe, pe_freqs):
    pe_half = len(pe_freqs)

    def kernel(x_ref, *rest):
        o_ref = rest[-1]
        refs = rest[:-1]

        x = x_ref[0]                       # (in_dim, tn), tokens on the lane axis

        if use_pe:
            # proj[d*pe_half + k, :] = x[d, :] * w[k]  (exact f32 VPU multiplies,
            # cheap sublane concat of an (in_dim*pe_half)-row slab).
            rows = []
            for d in range(in_dim):
                xd = x[d:d + 1, :]
                for k in range(pe_half):
                    rows.append(xd * pe_freqs[k])
            proj = jnp.pi * jnp.concatenate(rows, axis=0)   # (in_dim*pe_half, tn)
            # Layer 0 with the cos/sin halves folded into two accumulating dots:
            #   h = W0_cos @ cos(proj) + W0_sin @ sin(proj) + b0
            w0a = refs[0][0]               # (C0, in_dim*pe_half)  cos rows
            w0b = refs[1][0]               # (C0, in_dim*pe_half)  sin rows
            b0 = refs[2][0]                # (C0, 1)
            idx = 3
            h = (jnp.dot(w0a, jnp.cos(proj), preferred_element_type=jnp.float32)
                 + jnp.dot(w0b, jnp.sin(proj), preferred_element_type=jnp.float32)
                 + b0)
        else:
            w0 = refs[0][0]                # (C0, in_dim)
            b0 = refs[1][0]                # (C0, 1)
            idx = 2
            h = jnp.dot(w0, x, preferred_element_type=jnp.float32) + b0

        if depth > 1:
            h = jnp.maximum(h, 0.0)        # ReLU

        for i in range(1, depth):
            w = refs[idx][0]               # (C_i, D_i)
            b = refs[idx + 1][0]           # (C_i, 1)
            idx += 2
            h = jnp.dot(w, h, preferred_element_type=jnp.float32) + b
            if i < depth - 1:
                h = jnp.maximum(h, 0.0)

        # out_bias was folded into the last layer's bias row in the wrapper.
        o_ref[0] = h.astype(o_ref.dtype)

    return kernel


# --------------------------------------------------------------------------
# Wrapper
# --------------------------------------------------------------------------
def hypo_mlp_forward(x, params, *, depth, in_dim, out_dim, hidden_dim,
                     use_pe, pe_dim, pe_sigma, out_bias, token_tile=2048):
    """x: (B, *query_shape, in_dim) f32.  params['wb{i}']: (B, D_i+1, C_i)."""
    B = x.shape[0]
    query_shape = x.shape[1:-1]
    x_flat = x.reshape(B, -1, in_dim)
    N = x_flat.shape[1]

    # --- feature-major layout: tokens on the 128-lane axis -------------------
    x_fm = jnp.transpose(x_flat, (0, 2, 1))                  # (B, in_dim, N)

    token_tile = _round_up(max(token_tile, 128), 128)
    tn = min(token_tile, _round_up(N, 128))
    n_pad = _round_up(N, tn)
    if n_pad != N:                                           # pad the token axis
        x_fm = jnp.pad(x_fm, ((0, 0), (0, 0), (0, n_pad - N)))

    pe_half = pe_dim // 2
    freqs = [float(v) for v in _pe_freqs(pe_dim, pe_sigma)] if use_pe else []

    # --- weight plumbing: split bias row off, transpose to (C, D) ------------
    inputs = [x_fm]
    in_specs = [pl.BlockSpec((1, in_dim, tn), lambda b, n: (b, 0, n))]

    def _w_spec(c, d):
        return pl.BlockSpec((1, c, d), lambda b, n: (b, 0, 0))

    def _b_spec(c):
        return pl.BlockSpec((1, c, 1), lambda b, n: (b, 0, 0))

    wb0 = params["wb0"]
    c0 = wb0.shape[2]
    b0 = jnp.transpose(wb0[:, -1:, :], (0, 2, 1))            # (B, C0, 1)
    if depth == 1:
        b0 = b0 + out_bias
    if use_pe:
        m = in_dim * pe_half
        w0a = jnp.transpose(wb0[:, :m, :], (0, 2, 1))        # cos rows  (B, C0, M)
        w0b = jnp.transpose(wb0[:, m:2 * m, :], (0, 2, 1))   # sin rows  (B, C0, M)
        inputs += [w0a, w0b, b0]
        in_specs += [_w_spec(c0, m), _w_spec(c0, m), _b_spec(c0)]
    else:
        w0 = jnp.transpose(wb0[:, :-1, :], (0, 2, 1))        # (B, C0, in_dim)
        inputs += [w0, b0]
        in_specs += [_w_spec(c0, in_dim), _b_spec(c0)]

    for i in range(1, depth):
        wb = params[f"wb{i}"]
        di, ci = wb.shape[1] - 1, wb.shape[2]
        w_t = jnp.transpose(wb[:, :-1, :], (0, 2, 1))        # (B, Ci, Di)
        b_i = jnp.transpose(wb[:, -1:, :], (0, 2, 1))        # (B, Ci, 1)
        if i == depth - 1:
            b_i = b_i + out_bias                             # fold scalar out_bias
        inputs += [w_t, b_i]
        in_specs += [_w_spec(ci, di), _b_spec(ci)]

    kernel = _make_hypo_mlp_kernel(depth, in_dim, use_pe, freqs)

    grid = (B, n_pad // tn)
    out = pl.pallas_call(
        kernel,
        out_shape=jax.ShapeDtypeStruct((B, out_dim, n_pad), jnp.float32),
        grid_spec=pltpu.PrefetchScalarGridSpec(
            num_scalar_prefetch=0,
            grid=grid,
            in_specs=in_specs,
            out_specs=pl.BlockSpec((1, out_dim, tn), lambda b, n: (b, 0, n)),
        ),
        compiler_params=pltpu.CompilerParams(
            dimension_semantics=("parallel", "parallel")),
    )(*inputs)

    out = out[:, :, :N]                                      # drop token padding
    out = jnp.transpose(out, (0, 2, 1))                      # (B, N, out_dim)
    return out.reshape(B, *query_shape, out_dim)


# --------------------------------------------------------------------------
# Pure-JAX reference (mirror of the PyTorch forward) for verification
# --------------------------------------------------------------------------
def hypo_mlp_reference(x, params, *, depth, in_dim, use_pe, pe_dim, pe_sigma,
                       out_bias):
    B = x.shape[0]
    query_shape = x.shape[1:-1]
    h = x.reshape(B, -1, in_dim)
    if use_pe:
        w = jnp.asarray(_pe_freqs(pe_dim, pe_sigma))
        proj = (h[..., None] * w).reshape(B, h.shape[1], -1)
        h = jnp.concatenate([jnp.cos(jnp.pi * proj), jnp.sin(jnp.pi * proj)],
                            axis=-1)
    for i in range(depth):
        ones = jnp.ones(h.shape[:-1] + (1,), dtype=h.dtype)
        h = jnp.einsum("bnd,bdc->bnc", jnp.concatenate([h, ones], axis=-1),
                       params[f"wb{i}"])
        if i < depth - 1:
            h = jnp.maximum(h, 0.0)
        else:
            h = h + out_bias
    return h.reshape(B, *query_shape, -1)


# --------------------------------------------------------------------------
# Main
# --------------------------------------------------------------------------
if __name__ == "__main__":
    # Module config (small, consistent with HypoMlp.__init__)
    depth = 3
    in_dim = 2          # 2-D query coordinates
    out_dim = 4
    hidden_dim = 32
    use_pe = True
    pe_dim = 8
    pe_sigma = 1024.0
    out_bias = 0.5

    B, H, W = 2, 16, 16   # 256 query tokens per sample

    key = jax.random.PRNGKey(0)
    kx, kp = jax.random.split(key)

    # deterministic example coordinates in [-1, 1]
    x = jax.random.uniform(kx, (B, H, W, in_dim), dtype=jnp.float32,
                           minval=-1.0, maxval=1.0)

    # deterministic per-sample hyponetwork parameters (shapes from __init__,
    # with a leading batch dim as set_params supplies in the hypernet setting)
    params = {}
    last_dim = in_dim * pe_dim if use_pe else in_dim
    for i in range(depth):
        cur_dim = hidden_dim if i < depth - 1 else out_dim
        kp, sub = jax.random.split(kp)
        scale = 1.0 / jnp.sqrt(jnp.float32(last_dim + 1))
        params[f"wb{i}"] = scale * jax.random.normal(
            sub, (B, last_dim + 1, cur_dim), dtype=jnp.float32)
        last_dim = cur_dim

    fwd = functools.partial(
        hypo_mlp_forward, depth=depth, in_dim=in_dim, out_dim=out_dim,
        hidden_dim=hidden_dim, use_pe=use_pe, pe_dim=pe_dim,
        pe_sigma=pe_sigma, out_bias=out_bias, token_tile=2048)

    y = jax.block_until_ready(fwd(x, params))

    y_ref = hypo_mlp_reference(
        x, params, depth=depth, in_dim=in_dim, use_pe=use_pe,
        pe_dim=pe_dim, pe_sigma=pe_sigma, out_bias=out_bias)

    assert y.shape == (B, H, W, out_dim), y.shape
    max_err = float(jnp.max(jnp.abs(y - y_ref)))
    assert max_err < 5e-4, f"max abs error vs reference: {max_err}"

    print("KERNEL_OK")
</pallas_src>

<mosaic_0001>
module attributes {stable_mosaic.version = 11 : i64} {
  func.func @kernel(%arg0: i32, %arg1: i32, %arg2: memref<1x2x256xf32, #tpu.memory_space<vmem>>, %arg3: memref<1x32x8xf32, #tpu.memory_space<vmem>>, %arg4: memref<1x32x8xf32, #tpu.memory_space<vmem>>, %arg5: memref<1x32x1xf32, #tpu.memory_space<vmem>>, %arg6: memref<1x32x32xf32, #tpu.memory_space<vmem>>, %arg7: memref<1x32x1xf32, #tpu.memory_space<vmem>>, %arg8: memref<1x4x32xf32, #tpu.memory_space<vmem>>, %arg9: memref<1x4x1xf32, #tpu.memory_space<vmem>>, %arg10: memref<1x4x256xf32, #tpu.memory_space<vmem>>) attributes {dimension_semantics = [#tpu.dimension_semantics<parallel>, #tpu.dimension_semantics<parallel>], iteration_bounds = array<i64: 2, 1>, scalar_prefetch = 0 : i64, scratch_operands = 0 : i64, tpu.core_type = #tpu.core_type<tc>, window_params = [{transform_indices = @transform_0, window_bounds = array<i64: 1, 2, 256>}, {transform_indices = @transform_1, window_bounds = array<i64: 1, 32, 8>}, {transform_indices = @transform_2, window_bounds = array<i64: 1, 32, 8>}, {transform_indices = @transform_3, window_bounds = array<i64: 1, 32, 1>}, {transform_indices = @transform_4, window_bounds = array<i64: 1, 32, 32>}, {transform_indices = @transform_5, window_bounds = array<i64: 1, 32, 1>}, {transform_indices = @transform_6, window_bounds = array<i64: 1, 4, 32>}, {transform_indices = @transform_7, window_bounds = array<i64: 1, 4, 1>}, {transform_indices = @transform_8, window_bounds = array<i64: 1, 4, 256>}]} {
    %c0 = arith.constant 0 : index
    %c0_0 = arith.constant 0 : index
    %c0_1 = arith.constant 0 : index
    %0 = vector.load %arg2[%c0, %c0_0, %c0_1] : memref<1x2x256xf32, #tpu.memory_space<vmem>>, vector<1x2x256xf32>
    %1 = vector.shape_cast %0 : vector<1x2x256xf32> to vector<2x256xf32>
    %2 = vector.extract_strided_slice %1 {offsets = [0, 0], sizes = [1, 256], strides = [1, 1]} : vector<2x256xf32> to vector<1x256xf32>
    %cst = arith.constant 1.000000e+00 : f32
    %3 = vector.broadcast %cst : f32 to vector<1x256xf32>
    %4 = arith.mulf %2, %3 : vector<1x256xf32>
    %cst_2 = arith.constant 10.0793686 : f32
    %5 = vector.broadcast %cst_2 : f32 to vector<1x256xf32>
    %6 = arith.mulf %2, %5 : vector<1x256xf32>
    %cst_3 = arith.constant 101.593666 : f32
    %7 = vector.broadcast %cst_3 : f32 to vector<1x256xf32>
    %8 = arith.mulf %2, %7 : vector<1x256xf32>
    %cst_4 = arith.constant 1.024000e+03 : f32
    %9 = vector.broadcast %cst_4 : f32 to vector<1x256xf32>
    %10 = arith.mulf %2, %9 : vector<1x256xf32>
    %11 = vector.extract_strided_slice %1 {offsets = [1, 0], sizes = [1, 256], strides = [1, 1]} : vector<2x256xf32> to vector<1x256xf32>
    %cst_5 = arith.constant 1.000000e+00 : f32
    %12 = vector.broadcast %cst_5 : f32 to vector<1x256xf32>
    %13 = arith.mulf %11, %12 : vector<1x256xf32>
    %cst_6 = arith.constant 10.0793686 : f32
    %14 = vector.broadcast %cst_6 : f32 to vector<1x256xf32>
    %15 = arith.mulf %11, %14 : vector<1x256xf32>
    %cst_7 = arith.constant 101.593666 : f32
    %16 = vector.broadcast %cst_7 : f32 to vector<1x256xf32>
    %17 = arith.mulf %11, %16 : vector<1x256xf32>
    %cst_8 = arith.constant 1.024000e+03 : f32
    %18 = vector.broadcast %cst_8 : f32 to vector<1x256xf32>
    %19 = arith.mulf %11, %18 : vector<1x256xf32>
    %20 = tpu.concatenate %4, %6, %8, %10, %13, %15, %17, %19 in 0 : vector<1x256xf32>, vector<1x256xf32>, vector<1x256xf32>, vector<1x256xf32>, vector<1x256xf32>, vector<1x256xf32>, vector<1x256xf32>, vector<1x256xf32> -> vector<8x256xf32>
    %cst_9 = arith.constant 3.14159274 : f32
    %21 = vector.broadcast %cst_9 : f32 to vector<8x256xf32>
    %22 = arith.mulf %21, %20 : vector<8x256xf32>
    %c0_10 = arith.constant 0 : index
    %c0_11 = arith.constant 0 : index
    %c0_12 = arith.constant 0 : index
    %23 = vector.load %arg3[%c0_10, %c0_11, %c0_12] : memref<1x32x8xf32, #tpu.memory_space<vmem>>, vector<1x32x8xf32>
    %24 = vector.shape_cast %23 : vector<1x32x8xf32> to vector<32x8xf32>
    %c0_13 = arith.constant 0 : index
    %c0_14 = arith.constant 0 : index
    %c0_15 = arith.constant 0 : index
    %25 = vector.load %arg4[%c0_13, %c0_14, %c0_15] : memref<1x32x8xf32, #tpu.memory_space<vmem>>, vector<1x32x8xf32>
    %26 = vector.shape_cast %25 : vector<1x32x8xf32> to vector<32x8xf32>
    %c0_16 = arith.constant 0 : index
    %c0_17 = arith.constant 0 : index
    %c0_18 = arith.constant 0 : index
    %27 = vector.load %arg5[%c0_16, %c0_17, %c0_18] : memref<1x32x1xf32, #tpu.memory_space<vmem>>, vector<1x32x1xf32>
    %28 = vector.shape_cast %27 : vector<1x32x1xf32> to vector<32x1xf32>
    %29 = math.cos %22 : vector<8x256xf32>
    %cst_19 = arith.constant dense<0.000000e+00> : vector<32x256xf32>
    %30 = tpu.matmul %24, %29, %cst_19 {dimension_numbers = #tpu.dot_dimension_numbers<[1], [0], [0], [1], [0, 0, 1, 1], [], []>} : vector<32x8xf32>, vector<8x256xf32>, vector<32x256xf32> -> vector<32x256xf32>
    %31 = math.sin %22 : vector<8x256xf32>
    %cst_20 = arith.constant dense<0.000000e+00> : vector<32x256xf32>
    %32 = tpu.matmul %26, %31, %cst_20 {dimension_numbers = #tpu.dot_dimension_numbers<[1], [0], [0], [1], [0, 0, 1, 1], [], []>} : vector<32x8xf32>, vector<8x256xf32>, vector<32x256xf32> -> vector<32x256xf32>
    %33 = arith.addf %30, %32 : vector<32x256xf32>
    %34 = vector.broadcast %28 : vector<32x1xf32> to vector<32x256xf32>
    %35 = arith.addf %33, %34 : vector<32x256xf32>
    %cst_21 = arith.constant 0.000000e+00 : f32
    %36 = vector.broadcast %cst_21 : f32 to vector<32x256xf32>
    %37 = arith.maximumf %35, %36 : vector<32x256xf32>
    %c0_22 = arith.constant 0 : index
    %c0_23 = arith.constant 0 : index
    %c0_24 = arith.constant 0 : index
    %38 = vector.load %arg6[%c0_22, %c0_23, %c0_24] : memref<1x32x32xf32, #tpu.memory_space<vmem>>, vector<1x32x32xf32>
    %39 = vector.shape_cast %38 : vector<1x32x32xf32> to vector<32x32xf32>
    %c0_25 = arith.constant 0 : index
    %c0_26 = arith.constant 0 : index
    %c0_27 = arith.constant 0 : index
    %40 = vector.load %arg7[%c0_25, %c0_26, %c0_27] : memref<1x32x1xf32, #tpu.memory_space<vmem>>, vector<1x32x1xf32>
    %41 = vector.shape_cast %40 : vector<1x32x1xf32> to vector<32x1xf32>
    %cst_28 = arith.constant dense<0.000000e+00> : vector<32x256xf32>
    %42 = tpu.matmul %39, %37, %cst_28 {dimension_numbers = #tpu.dot_dimension_numbers<[1], [0], [0], [1], [0, 0, 1, 1], [], []>} : vector<32x32xf32>, vector<32x256xf32>, vector<32x256xf32> -> vector<32x256xf32>
    %43 = vector.broadcast %41 : vector<32x1xf32> to vector<32x256xf32>
    %44 = arith.addf %42, %43 : vector<32x256xf32>
    %cst_29 = arith.constant 0.000000e+00 : f32
    %45 = vector.broadcast %cst_29 : f32 to vector<32x256xf32>
    %46 = arith.maximumf %44, %45 : vector<32x256xf32>
    %c0_30 = arith.constant 0 : index
    %c0_31 = arith.constant 0 : index
    %c0_32 = arith.constant 0 : index
    %47 = vector.load %arg8[%c0_30, %c0_31, %c0_32] : memref<1x4x32xf32, #tpu.memory_space<vmem>>, vector<1x4x32xf32>
    %48 = vector.shape_cast %47 : vector<1x4x32xf32> to vector<4x32xf32>
    %c0_33 = arith.constant 0 : index
    %c0_34 = arith.constant 0 : index
    %c0_35 = arith.constant 0 : index
    %49 = vector.load %arg9[%c0_33, %c0_34, %c0_35] : memref<1x4x1xf32, #tpu.memory_space<vmem>>, vector<1x4x1xf32>
    %50 = vector.shape_cast %49 : vector<1x4x1xf32> to vector<4x1xf32>
    %cst_36 = arith.constant dense<0.000000e+00> : vector<4x256xf32>
    %51 = tpu.matmul %48, %46, %cst_36 {dimension_numbers = #tpu.dot_dimension_numbers<[1], [0], [0], [1], [0, 0, 1, 1], [], []>} : vector<4x32xf32>, vector<32x256xf32>, vector<4x256xf32> -> vector<4x256xf32>
    %52 = vector.broadcast %50 : vector<4x1xf32> to vector<4x256xf32>
    %53 = arith.addf %51, %52 : vector<4x256xf32>
    %c0_37 = arith.constant 0 : index
    %c0_38 = arith.constant 0 : index
    %c0_39 = arith.constant 0 : index
    %54 = vector.load %arg10[%c0_37, %c0_38, %c0_39] : memref<1x4x256xf32, #tpu.memory_space<vmem>>, vector<1x4x256xf32>
    %55 = vector.shape_cast %54 : vector<1x4x256xf32> to vector<4x256xf32>
    %56 = vector.shape_cast %53 : vector<4x256xf32> to vector<1x4x256xf32>
    tpu.vector_store %arg10[%c0_37, %c0_38, %c0_39], %56 {strides = array<i32>} : memref<1x4x256xf32, #tpu.memory_space<vmem>>, vector<1x4x256xf32>,
    return
  }
  func.func @transform_0(%arg0: i32, %arg1: i32) -> (i32, i32, i32) {
    %c0_i32 = arith.constant 0 : i32
    %c0_i32_0 = arith.constant 0 : i32
    return %arg0, %c0_i32, %arg1 : i32, i32, i32
  }
  func.func @transform_1(%arg0: i32, %arg1: i32) -> (i32, i32, i32) {
    %c0_i32 = arith.constant 0 : i32
    %c0_i32_0 = arith.constant 0 : i32
    %c0_i32_1 = arith.constant 0 : i32
    return %arg0, %c0_i32, %c0_i32_0 : i32, i32, i32
  }
  func.func @transform_2(%arg0: i32, %arg1: i32) -> (i32, i32, i32) {
    %c0_i32 = arith.constant 0 : i32
    %c0_i32_0 = arith.constant 0 : i32
    %c0_i32_1 = arith.constant 0 : i32
    return %arg0, %c0_i32, %c0_i32_0 : i32, i32, i32
  }
  func.func @transform_3(%arg0: i32, %arg1: i32) -> (i32, i32, i32) {
    %c0_i32 = arith.constant 0 : i32
    %c0_i32_0 = arith.constant 0 : i32
    %c0_i32_1 = arith.constant 0 : i32
    return %arg0, %c0_i32, %c0_i32_0 : i32, i32, i32
  }
  func.func @transform_4(%arg0: i32, %arg1: i32) -> (i32, i32, i32) {
    %c0_i32 = arith.constant 0 : i32
    %c0_i32_0 = arith.constant 0 : i32
    %c0_i32_1 = arith.constant 0 : i32
    return %arg0, %c0_i32, %c0_i32_0 : i32, i32, i32
  }
  func.func @transform_5(%arg0: i32, %arg1: i32) -> (i32, i32, i32) {
    %c0_i32 = arith.constant 0 : i32
    %c0_i32_0 = arith.constant 0 : i32
    %c0_i32_1 = arith.constant 0 : i32
    return %arg0, %c0_i32, %c0_i32_0 : i32, i32, i32
  }
  func.func @transform_6(%arg0: i32, %arg1: i32) -> (i32, i32, i32) {
    %c0_i32 = arith.constant 0 : i32
    %c0_i32_0 = arith.constant 0 : i32
    %c0_i32_1 = arith.constant 0 : i32
    return %arg0, %c0_i32, %c0_i32_0 : i32, i32, i32
  }
  func.func @transform_7(%arg0: i32, %arg1: i32) -> (i32, i32, i32) {
    %c0_i32 = arith.constant 0 : i32
    %c0_i32_0 = arith.constant 0 : i32
    %c0_i32_1 = arith.constant 0 : i32
    return %arg0, %c0_i32, %c0_i32_0 : i32, i32, i32
  }
  func.func @transform_8(%arg0: i32, %arg1: i32) -> (i32, i32, i32) {
    %c0_i32 = arith.constant 0 : i32
    %c0_i32_0 = arith.constant 0 : i32
    return %arg0, %c0_i32, %arg1 : i32, i32, i32
  }
}

</mosaic_0001>

<llo_original>
// kernel: tpu_custom_call.1
$region0: #{tpu_custom_call.1}
  #allocation0 [shape = 'u32[]', space=smem, size = 0x4, offset = 0x4, fixed_abs, tag = 'smem constant byte address 0x4 - core index']
  #allocation1 [shape = 'u32[144,128]{1,0:T(1,128)}', space=vmem, size = 0x12000, scoped, tag = 'internal scratch']
  %s0 = inlined_call_operand.vmem [shape: f32[2,2,256], index: 0, kind: input, shape index: {}]
  %s1 = inlined_call_operand.vmem [shape: f32[2,32,8], index: 1, kind: input, shape index: {}]
  %s2 = inlined_call_operand.vmem [shape: f32[2,32,8], index: 2, kind: input, shape index: {}]
  %s3 = inlined_call_operand.vmem [shape: f32[2,32,1], index: 3, kind: input, shape index: {}]
  %s4 = inlined_call_operand.vmem [shape: f32[2,32,32], index: 4, kind: input, shape index: {}]
  %s5 = inlined_call_operand.vmem [shape: f32[2,32,1], index: 5, kind: input, shape index: {}]
  %s6 = inlined_call_operand.vmem [shape: f32[2,4,32], index: 6, kind: input, shape index: {}]
  %s7 = inlined_call_operand.vmem [shape: f32[2,4,1], index: 7, kind: input, shape index: {}]
  %s8 = inlined_call_operand.hbm [shape: f32[2,4,256], index: 8, kind: output, shape index: {}]
  %s9 = sld [smem:[#allocation0]]
  $region65: #{tpu_custom_call.1} parent=0
    _
  %s11 = ssub.s32 1, %s9
  %s12 = scalar_select 0, %s11, %s9
  $region1: #{tpu_custom_call.1} parent=0
    #allocation2 [shape = 'u8[8192]{0}', space=vmem, size = 0x2000, scoped, tag = 'output window, operand 0']
    #allocation3 [shape = 's32[2]{0}', space=sflag, size = 0x8, scoped, tag = 'scoped memory for tpu_custom_call.1']
    %13 = vsyncpa [#allocation3], 0
    %s14 = scalar_lea.sflag [#allocation3], 1
    %15 = vsyncpa %s14, 0
    loop: start=0, step=1, limit=4
    $region2: #{tpu_custom_call.1} parent=1 // loop_pre_header
      _
    $region3: #{tpu_custom_call.1} parent=1 // loop_header
      %s17 = sphi 0, %s21
      %p18 = scmp.ge.s32.totalorder %s17, 4
      %s24 = sphi 0, %s36
      %s25 = sphi 0, %s32
      %s26 = sphi 0, %s24
      %s27 = sphi 0, %s25
      %s28 = sphi 0, %s26
      %s29 = sphi 0, %s27
      %s41 = sphi 0, %s43
      %s44 = sphi 0, %s41
      %s45 = sphi 0, %s44
      %s61 = sphi 0, %s45
      %s67 = sphi 0, %s69
      %s70 = sphi 0, %s67
      %s71 = sphi 0, %s70
      %s87 = sphi 0, %s71
      %s93 = sphi 0, %s95
      %s96 = sphi 0, %s93
      %s97 = sphi 0, %s96
      %s113 = sphi 0, %s97
      %s119 = sphi 0, %s121
      %s122 = sphi 0, %s119
      %s123 = sphi 0, %s122
      %s139 = sphi 0, %s123
      %s145 = sphi 0, %s147
      %s148 = sphi 0, %s145
      %s149 = sphi 0, %s148
      %s165 = sphi 0, %s149
      %s171 = sphi 0, %s173
      %s174 = sphi 0, %s171
      %s175 = sphi 0, %s174
      %s191 = sphi 0, %s175
      %s197 = sphi 0, %s199
      %s200 = sphi 0, %s197
      %s201 = sphi 0, %s200
      %s217 = sphi 0, %s201
      %s223 = sphi 0, %s225
      %s226 = sphi 0, %s223
      %s227 = sphi 0, %s226
      %s243 = sphi 0, %s227
      %s251 = sphi 0, %s253
      %s254 = sphi 0, %s251
      %s255 = sphi 0, %s254
      %s271 = sphi 0, %s255
    $region4: #{tpu_custom_call.1} parent=1 // loop_header_branch
      %20 = sbr.rel (%p18) target = $region8
    $region5: #{tpu_custom_call.1} parent=1 // loop_body
      %s22 = ssub.s32 %s17, 1
      %s23 = ssub.s32 %s17, 2
      %s30 = sadd.s32 1, %s25
      %p31 = scmp.ge.s32.totalorder %s30, 1
      %s32 = scalar_select %p31, 0, %s30
      %s33 = sadd.s32 1, %s24
      %s34 = scalar_select %p31, %s33, %s24
      %p35 = scmp.ge.s32.totalorder %s34, 2
      %s36 = scalar_select %p35, 0, %s34
      %s37 = ssub.s32 %s24, %s36
      %s38 = ssub.s32 %s25, %s32
      %s39 = sor.u32 %s37, %s38
      %p40 = scmp.eq.s32.totalorder %s39, 0
      %s42 = sadd.s32 %s41, 1
      %s43 = scalar_select %p40, %s41, %s42
      %p46 = pneg %p40
      %p47 = scmp.eq.s32.totalorder %s17, 1
      %p48 = por %p46, %p47
      %p49 = scmp.ne.s32.totalorder %s41, %s44
      %p50 = scmp.eq.s32.totalorder %s17, 0
      %p51 = por %p49, %p50
      %p52 = scmp.ne.s32.totalorder %s41, %s44
      %p53 = scmp.eq.s32.totalorder %s22, 1
      %p54 = por %p52, %p53
      %p55 = scmp.ne.s32.totalorder %s44, %s45
      %p56 = scmp.eq.s32.totalorder %s22, 0
      %p57 = por %p55, %p56
      %p58 = scmp.ne.s32.totalorder %s44, %s45
      %p59 = scmp.eq.s32.totalorder %s23, 1
      %p60 = por %p58, %p59
      %p62 = scmp.ne.s32.totalorder %s45, %s61
      %p63 = scmp.eq.s32.totalorder %s23, 0
      %p64 = por %p62, %p63
      %s65 = ssub.s32 %s24, %s36
      %p66 = scmp.eq.s32.totalorder %s65, 0
      %s68 = sadd.s32 %s67, 1
      %s69 = scalar_select %p66, %s67, %s68
      %p72 = pneg %p66
      %p73 = scmp.eq.s32.totalorder %s17, 1
      %p74 = por %p72, %p73
      %p75 = scmp.ne.s32.totalorder %s67, %s70
      %p76 = scmp.eq.s32.totalorder %s17, 0
      %p77 = por %p75, %p76
      %p78 = scmp.ne.s32.totalorder %s67, %s70
      %p79 = scmp.eq.s32.totalorder %s22, 1
      %p80 = por %p78, %p79
      %p81 = scmp.ne.s32.totalorder %s70, %s71
      %p82 = scmp.eq.s32.totalorder %s22, 0
      %p83 = por %p81, %p82
      %p84 = scmp.ne.s32.totalorder %s70, %s71
      %p85 = scmp.eq.s32.totalorder %s23, 1
      %p86 = por %p84, %p85
      %p88 = scmp.ne.s32.totalorder %s71, %s87
      %p89 = scmp.eq.s32.totalorder %s23, 0
      %p90 = por %p88, %p89
      %s91 = ssub.s32 %s24, %s36
      %p92 = scmp.eq.s32.totalorder %s91, 0
      %s94 = sadd.s32 %s93, 1
      %s95 = scalar_select %p92, %s93, %s94
      %p98 = pneg %p92
      %p99 = scmp.eq.s32.totalorder %s17, 1
      %p100 = por %p98, %p99
      %p101 = scmp.ne.s32.totalorder %s93, %s96
      %p102 = scmp.eq.s32.totalorder %s17, 0
      %p103 = por %p101, %p102
      %p104 = scmp.ne.s32.totalorder %s93, %s96
      %p105 = scmp.eq.s32.totalorder %s22, 1
      %p106 = por %p104, %p105
      %p107 = scmp.ne.s32.totalorder %s96, %s97
      %p108 = scmp.eq.s32.totalorder %s22, 0
      %p109 = por %p107, %p108
      %p110 = scmp.ne.s32.totalorder %s96, %s97
      %p111 = scmp.eq.s32.totalorder %s23, 1
      %p112 = por %p110, %p111
      %p114 = scmp.ne.s32.totalorder %s97, %s113
      %p115 = scmp.eq.s32.totalorder %s23, 0
      %p116 = por %p114, %p115
      %s117 = ssub.s32 %s24, %s36
      %p118 = scmp.eq.s32.totalorder %s117, 0
      %s120 = sadd.s32 %s119, 1
      %s121 = scalar_select %p118, %s119, %s120
      %p124 = pneg %p118
      %p125 = scmp.eq.s32.totalorder %s17, 1
      %p126 = por %p124, %p125
      %p127 = scmp.ne.s32.totalorder %s119, %s122
      %p128 = scmp.eq.s32.totalorder %s17, 0
      %p129 = por %p127, %p128
      %p130 = scmp.ne.s32.totalorder %s119, %s122
      %p131 = scmp.eq.s32.totalorder %s22, 1
      %p132 = por %p130, %p131
      %p133 = scmp.ne.s32.totalorder %s122, %s123
      %p134 = scmp.eq.s32.totalorder %s22, 0
      %p135 = por %p133, %p134
      %p136 = scmp.ne.s32.totalorder %s122, %s123
      %p137 = scmp.eq.s32.totalorder %s23, 1
      %p138 = por %p136, %p137
      %p140 = scmp.ne.s32.totalorder %s123, %s139
      %p141 = scmp.eq.s32.totalorder %s23, 0
      %p142 = por %p140, %p141
      %s143 = ssub.s32 %s24, %s36
      %p144 = scmp.eq.s32.totalorder %s143, 0
      %s146 = sadd.s32 %s145, 1
      %s147 = scalar_select %p144, %s145, %s146
      %p150 = pneg %p144
      %p151 = scmp.eq.s32.totalorder %s17, 1
      %p152 = por %p150, %p151
      %p153 = scmp.ne.s32.totalorder %s145, %s148
      %p154 = scmp.eq.s32.totalorder %s17, 0
      %p155 = por %p153, %p154
      %p156 = scmp.ne.s32.totalorder %s145, %s148
      %p157 = scmp.eq.s32.totalorder %s22, 1
      %p158 = por %p156, %p157
      %p159 = scmp.ne.s32.totalorder %s148, %s149
      %p160 = scmp.eq.s32.totalorder %s22, 0
      %p161 = por %p159, %p160
      %p162 = scmp.ne.s32.totalorder %s148, %s149
      %p163 = scmp.eq.s32.totalorder %s23, 1
      %p164 = por %p162, %p163
      %p166 = scmp.ne.s32.totalorder %s149, %s165
      %p167 = scmp.eq.s32.totalorder %s23, 0
      %p168 = por %p166, %p167
      %s169 = ssub.s32 %s24, %s36
      %p170 = scmp.eq.s32.totalorder %s169, 0
      %s172 = sadd.s32 %s171, 1
      %s173 = scalar_select %p170, %s171, %s172
      %p176 = pneg %p170
      %p177 = scmp.eq.s32.totalorder %s17, 1
      %p178 = por %p176, %p177
      %p179 = scmp.ne.s32.totalorder %s171, %s174
      %p180 = scmp.eq.s32.totalorder %s17, 0
      %p181 = por %p179, %p180
      %p182 = scmp.ne.s32.totalorder %s171, %s174
      %p183 = scmp.eq.s32.totalorder %s22, 1
      %p184 = por %p182, %p183
      %p185 = scmp.ne.s32.totalorder %s174, %s175
      %p186 = scmp.eq.s32.totalorder %s22, 0
      %p187 = por %p185, %p186
      %p188 = scmp.ne.s32.totalorder %s174, %s175
      %p189 = scmp.eq.s32.totalorder %s23, 1
      %p190 = por %p188, %p189
      %p192 = scmp.ne.s32.totalorder %s175, %s191
      %p193 = scmp.eq.s32.totalorder %s23, 0
      %p194 = por %p192, %p193
      %s195 = ssub.s32 %s24, %s36
      %p196 = scmp.eq.s32.totalorder %s195, 0
      %s198 = sadd.s32 %s197, 1
      %s199 = scalar_select %p196, %s197, %s198
      %p202 = pneg %p196
      %p203 = scmp.eq.s32.totalorder %s17, 1
      %p204 = por %p202, %p203
      %p205 = scmp.ne.s32.totalorder %s197, %s200
      %p206 = scmp.eq.s32.totalorder %s17, 0
      %p207 = por %p205, %p206
      %p208 = scmp.ne.s32.totalorder %s197, %s200
      %p209 = scmp.eq.s32.totalorder %s22, 1
      %p210 = por %p208, %p209
      %p211 = scmp.ne.s32.totalorder %s200, %s201
      %p212 = scmp.eq.s32.totalorder %s22, 0
      %p213 = por %p211, %p212
      %p214 = scmp.ne.s32.totalorder %s200, %s201
      %p215 = scmp.eq.s32.totalorder %s23, 1
      %p216 = por %p214, %p215
      %p218 = scmp.ne.s32.totalorder %s201, %s217
      %p219 = scmp.eq.s32.totalorder %s23, 0
      %p220 = por %p218, %p219
      %s221 = ssub.s32 %s24, %s36
      %p222 = scmp.eq.s32.totalorder %s221, 0
      %s224 = sadd.s32 %s223, 1
      %s225 = scalar_select %p222, %s223, %s224
      %p228 = pneg %p222
      %p229 = scmp.eq.s32.totalorder %s17, 1
      %p230 = por %p228, %p229
      %p231 = scmp.ne.s32.totalorder %s223, %s226
      %p232 = scmp.eq.s32.totalorder %s17, 0
      %p233 = por %p231, %p232
      %p234 = scmp.ne.s32.totalorder %s223, %s226
      %p235 = scmp.eq.s32.totalorder %s22, 1
      %p236 = por %p234, %p235
      %p237 = scmp.ne.s32.totalorder %s226, %s227
      %p238 = scmp.eq.s32.totalorder %s22, 0
      %p239 = por %p237, %p238
      %p240 = scmp.ne.s32.totalorder %s226, %s227
      %p241 = scmp.eq.s32.totalorder %s23, 1
      %p242 = por %p240, %p241
      %p244 = scmp.ne.s32.totalorder %s227, %s243
      %p245 = scmp.eq.s32.totalorder %s23, 0
      %p246 = por %p244, %p245
      %s247 = ssub.s32 %s24, %s36
      %s248 = ssub.s32 %s25, %s32
      %s249 = sor.u32 %s247, %s248
      %p250 = scmp.eq.s32.totalorder %s249, 0
      %s252 = sadd.s32 %s251, 1
      %s253 = scalar_select %p250, %s251, %s252
      %p256 = pneg %p250
      %p257 = scmp.eq.s32.totalorder %s17, 1
      %p258 = por %p256, %p257
      %p259 = scmp.ne.s32.totalorder %s251, %s254
      %p260 = scmp.eq.s32.totalorder %s17, 0
      %p261 = por %p259, %p260
      %p262 = scmp.ne.s32.totalorder %s251, %s254
      %p263 = scmp.eq.s32.totalorder %s22, 1
      %p264 = por %p262, %p263
      %p265 = scmp.ne.s32.totalorder %s254, %s255
      %p266 = scmp.eq.s32.totalorder %s22, 0
      %p267 = por %p265, %p266
      %p268 = scmp.ne.s32.totalorder %s254, %s255
      %p269 = scmp.eq.s32.totalorder %s23, 1
      %p270 = por %p268, %p269
      %p272 = scmp.ne.s32.totalorder %s255, %s271
      %p273 = scmp.eq.s32.totalorder %s23, 0
      %p274 = por %p272, %p273
      %p275 = scmp.le.s32.totalorder 1, %s17
      %p276 = scmp.lt.s32.totalorder %s17, 3
      %p277 = pnand %p275, %p276
      %p278 = pneg %p277
      // Predicated region
      $region9: #{tpu_custom_call.1} parent=5 // pred_check
        _
      $region10: #{tpu_custom_call.1} parent=5 // pred_check_branch
        %280 = sbr.rel (%p277) target = $region12
      $region11: #{tpu_custom_call.1} parent=5 // pred_region
        %s281 = ssub.s32 %s17, 1
      $region12: #{tpu_custom_call.1} parent=5 // pred_fallthru
        _
      %p282 = scmp.lt.s32.totalorder %s17, 2
      // Predicated region
      $region13: #{tpu_custom_call.1} parent=5 // pred_check
        %p283 = pneg %p282
      $region14: #{tpu_custom_call.1} parent=5 // pred_check_branch
        %285 = sbr.rel (%p283) target = $region16
      $region15: #{tpu_custom_call.1} parent=5 // pred_region
        // Predicated region
        $region17: #{tpu_custom_call.1} parent=15 // pred_check
          %p286 = pneg %p51
        $region18: #{tpu_custom_call.1} parent=15 // pred_check_branch
          %288 = sbr.rel (%p286) target = $region20
        $region19: #{tpu_custom_call.1} parent=15 // pred_region
          %s289 = smul.u32 2, %s25
          %p290 = scmp.lt.s32.totalorder %s24, 1
          %s291 = scalar_select %p290, %s24, 1
          %p292 = scmp.lt.s32.totalorder %s289, 1
          %s293 = scalar_select %p292, %s289, 1
          %s294 = smul.addr %s291, 2
          %s295 = sadd.s32 %s293, %s294
          %s296 = smul.addr %s295, 2
          %s297 = scalar_lea.vmem %s0, %s296
          %s298 = smul.u32 2, %s25
        $region20: #{tpu_custom_call.1} parent=15 // pred_fallthru
          _
        // Predicated region
        $region21: #{tpu_custom_call.1} parent=15 // pred_check
          %p299 = pneg %p77
        $region22: #{tpu_custom_call.1} parent=15 // pred_check_branch
          %301 = sbr.rel (%p299) target = $region24
        $region23: #{tpu_custom_call.1} parent=15 // pred_region
          %p302 = scmp.lt.s32.totalorder %s24, 1
          %s303 = scalar_select %p302, %s24, 1
          %s304 = smul.addr %s303, 4
          %s305 = smul.addr %s304, 8
          %s306 = scalar_lea.vmem %s1, %s305
        $region24: #{tpu_custom_call.1} parent=15 // pred_fallthru
          _
        // Predicated region
        $region25: #{tpu_custom_call.1} parent=15 // pred_check
          %p307 = pneg %p103
        $region26: #{tpu_custom_call.1} parent=15 // pred_check_branch
          %309 = sbr.rel (%p307) target = $region28
        $region27: #{tpu_custom_call.1} parent=15 // pred_region
          %p310 = scmp.lt.s32.totalorder %s24, 1
          %s311 = scalar_select %p310, %s24, 1
          %s312 = smul.addr %s311, 4
          %s313 = smul.addr %s312, 8
          %s314 = scalar_lea.vmem %s2, %s313
        $region28: #{tpu_custom_call.1} parent=15 // pred_fallthru
          _
        // Predicated region
        $region29: #{tpu_custom_call.1} parent=15 // pred_check
          %p315 = pneg %p129
        $region30: #{tpu_custom_call.1} parent=15 // pred_check_branch
          %317 = sbr.rel (%p315) target = $region32
        $region31: #{tpu_custom_call.1} parent=15 // pred_region
          %p318 = scmp.lt.s32.totalorder %s24, 1
          %s319 = scalar_select %p318, %s24, 1
          %s320 = smul.addr %s319, 4
          %s321 = smul.addr %s320, 8
          %s322 = scalar_lea.vmem %s3, %s321
        $region32: #{tpu_custom_call.1} parent=15 // pred_fallthru
          _
        // Predicated region
        $region33: #{tpu_custom_call.1} parent=15 // pred_check
          %p323 = pneg %p155
        $region34: #{tpu_custom_call.1} parent=15 // pred_check_branch
          %325 = sbr.rel (%p323) target = $region36
        $region35: #{tpu_custom_call.1} parent=15 // pred_region
          %p326 = scmp.lt.s32.totalorder %s24, 1
          %s327 = scalar_select %p326, %s24, 1
          %s328 = smul.addr %s327, 4
          %s329 = smul.addr %s328, 8
          %s330 = scalar_lea.vmem %s4, %s329
        $region36: #{tpu_custom_call.1} parent=15 // pred_fallthru
          _
        // Predicated region
        $region37: #{tpu_custom_call.1} parent=15 // pred_check
          %p331 = pneg %p181
        $region38: #{tpu_custom_call.1} parent=15 // pred_check_branch
          %333 = sbr.rel (%p331) target = $region40
        $region39: #{tpu_custom_call.1} parent=15 // pred_region
          %p334 = scmp.lt.s32.totalorder %s24, 1
          %s335 = scalar_select %p334, %s24, 1
          %s336 = smul.addr %s335, 4
          %s337 = smul.addr %s336, 8
          %s338 = scalar_lea.vmem %s5, %s337
        $region40: #{tpu_custom_call.1} parent=15 // pred_fallthru
          _
        // Predicated region
        $region41: #{tpu_custom_call.1} parent=15 // pred_check
          %p339 = pneg %p207
        $region42: #{tpu_custom_call.1} parent=15 // pred_check_branch
          %341 = sbr.rel (%p339) target = $region44
        $region43: #{tpu_custom_call.1} parent=15 // pred_region
          %p342 = scmp.lt.s32.totalorder %s24, 1
          %s343 = scalar_select %p342, %s24, 1
          %s344 = smul.addr %s343, 4
          %s345 = scalar_lea.vmem %s6, %s344
        $region44: #{tpu_custom_call.1} parent=15 // pred_fallthru
          _
        // Predicated region
        $region45: #{tpu_custom_call.1} parent=15 // pred_check
          %p346 = pneg %p233
        $region46: #{tpu_custom_call.1} parent=15 // pred_check_branch
          %348 = sbr.rel (%p346) target = $region48
        $region47: #{tpu_custom_call.1} parent=15 // pred_region
          %p349 = scmp.lt.s32.totalorder %s24, 1
          %s350 = scalar_select %p349, %s24, 1
          %s351 = smul.addr %s350, 4
          %s352 = scalar_lea.vmem %s7, %s351
        $region48: #{tpu_custom_call.1} parent=15 // pred_fallthru
          _
      $region16: #{tpu_custom_call.1} parent=5 // pred_fallthru
        _
      %p353 = scmp.le.s32.totalorder 1, %s17
      %p354 = scmp.lt.s32.totalorder %s17, 3
      %p355 = pnand %p353, %p354
      %p356 = pneg %p355
      // Predicated region
      $region49: #{tpu_custom_call.1} parent=5 // pred_check
        _
      $region50: #{tpu_custom_call.1} parent=5 // pred_check_branch
        %358 = sbr.rel (%p355) target = $region52
      $region51: #{tpu_custom_call.1} parent=5 // pred_region
        %s359 = ssub.s32 %s17, 1
        %s360 = smul.u32 2, %s27
        %p361 = scmp.lt.s32.totalorder %s26, 1
        %s362 = scalar_select %p361, %s26, 1
        %p363 = scmp.lt.s32.totalorder %s360, 1
        %s364 = scalar_select %p363, %s360, 1
        %s365 = smul.addr %s362, 2
        %s366 = sadd.s32 %s364, %s365
        %s367 = smul.addr %s366, 2
        %s368 = scalar_lea.vmem %s0, %s367
        %p369 = pneg %p57
        %p370 = pneg %p54
        %p371 = scmp.lt.s32.totalorder %s26, 1
        %s372 = scalar_select %p371, %s26, 1
        %s373 = smul.addr %s372, 4
        %s374 = smul.addr %s373, 8
        %s375 = scalar_lea.vmem %s1, %s374
        %p376 = pneg %p83
        %p377 = pneg %p80
        %p378 = scmp.lt.s32.totalorder %s26, 1
        %s379 = scalar_select %p378, %s26, 1
        %s380 = smul.addr %s379, 4
        %s381 = smul.addr %s380, 8
        %s382 = scalar_lea.vmem %s2, %s381
        %p383 = pneg %p109
        %p384 = pneg %p106
        %p385 = scmp.lt.s32.totalorder %s26, 1
        %s386 = scalar_select %p385, %s26, 1
        %s387 = smul.addr %s386, 4
        %s388 = smul.addr %s387, 8
        %s389 = scalar_lea.vmem %s3, %s388
        %p390 = pneg %p135
        %p391 = pneg %p132
        %p392 = scmp.lt.s32.totalorder %s26, 1
        %s393 = scalar_select %p392, %s26, 1
        %s394 = smul.addr %s393, 4
        %s395 = smul.addr %s394, 8
        %s396 = scalar_lea.vmem %s4, %s395
        %p397 = pneg %p161
        %p398 = pneg %p158
        %p399 = scmp.lt.s32.totalorder %s26, 1
        %s400 = scalar_select %p399, %s26, 1
        %s401 = smul.addr %s400, 4
        %s402 = smul.addr %s401, 8
        %s403 = scalar_lea.vmem %s5, %s402
        %p404 = pneg %p187
        %p405 = pneg %p184
        %p406 = scmp.lt.s32.totalorder %s26, 1
        %s407 = scalar_select %p406, %s26, 1
        %s408 = smul.addr %s407, 4
        %s409 = scalar_lea.vmem %s6, %s408
        %p410 = pneg %p213
        %p411 = pneg %p210
        %p412 = scmp.lt.s32.totalorder %s26, 1
        %s413 = scalar_select %p412, %s26, 1
        %s414 = smul.addr %s413, 4
        %s415 = scalar_lea.vmem %s7, %s414
        %p416 = pneg %p239
        %p417 = pneg %p236
        %p418 = pneg %p267
        %p419 = pneg %p264
        %s420 = sand.u32 %s254, 1
        %s421 = scalar_lea.sflag [#allocation3], %s420
        %s422 = sand.u32 %s254, 1
        %s423 = smul.addr %s422, 8
        %s424 = scalar_lea.vmem [#allocation2], %s423
        %s425 = smul.u32 2, %s27
        %p426 = scmp.lt.s32.totalorder %s26, 1
        %s427 = scalar_select %p426, %s26, 1
        %p428 = scmp.lt.s32.totalorder %s425, 1
        %s429 = scalar_select %p428, %s425, 1
        %s430 = smul.addr %s427, 2
        %s431 = sadd.s32 %s429, %s430
        %s432 = smul.addr %s431, 2
        %s433 = scalar_lea.vmem %s0, %s432
        %s434 = smul.u32 2, %s27
        %p435 = scmp.lt.s32.totalorder %s26, 1
        %s436 = scalar_select %p435, %s26, 1
        %s437 = smul.addr %s436, 4
        %s438 = smul.addr %s437, 8
        %s439 = scalar_lea.vmem %s1, %s438
        %p440 = scmp.lt.s32.totalorder %s26, 1
        %s441 = scalar_select %p440, %s26, 1
        %s442 = smul.addr %s441, 4
        %s443 = smul.addr %s442, 8
        %s444 = scalar_lea.vmem %s2, %s443
        %p445 = scmp.lt.s32.totalorder %s26, 1
        %s446 = scalar_select %p445, %s26, 1
        %s447 = smul.addr %s446, 4
        %s448 = smul.addr %s447, 8
        %s449 = scalar_lea.vmem %s3, %s448
        %p450 = scmp.lt.s32.totalorder %s26, 1
        %s451 = scalar_select %p450, %s26, 1
        %s452 = smul.addr %s451, 4
        %s453 = smul.addr %s452, 8
        %s454 = scalar_lea.vmem %s4, %s453
        %p455 = scmp.lt.s32.totalorder %s26, 1
        %s456 = scalar_select %p455, %s26, 1
        %s457 = smul.addr %s456, 4
        %s458 = smul.addr %s457, 8
        %s459 = scalar_lea.vmem %s5, %s458
        %p460 = scmp.lt.s32.totalorder %s26, 1
        %s461 = scalar_select %p460, %s26, 1
        %s462 = smul.addr %s461, 4
        %s463 = scalar_lea.vmem %s6, %s462
        %p464 = scmp.lt.s32.totalorder %s26, 1
        %s465 = scalar_select %p464, %s26, 1
        %s466 = smul.addr %s465, 4
        %s467 = scalar_lea.vmem %s7, %s466
        %s468 = smul.u32 2, %s27
        %v469 = vld [vmem:[%s433] sm:$0xf]
        %v470 = vmul.f32 %v469, 10.079369
        %v471 = vmul.f32 %v469, 101.593666
        %v472 = vmul.f32 %v469, 1024.0
        %v474 = vlaneseq
        %v475 = vshrl.u32 %v474, 7
        %v476 = vsub.s32 0, %v475
        %v477 = vrot.slane %v469, %v476
        %v478 = vlaneseq
        %v479 = vshrl.u32 %v478, 7
        %v480 = vsub.s32 2, %v479
        %v481 = vrot.slane %v469, %v480
        %v485 = vlaneseq
        %v486 = vshrl.u32 %v485, 7
        %v487 = vsub.s32 0, %v486
        %v488 = vrot.slane %v470, %v487
        %v489 = vlaneseq
        %v490 = vshrl.u32 %v489, 7
        %v491 = vsub.s32 2, %v490
        %v492 = vrot.slane %v470, %v491
        %v496 = vlaneseq
        %v497 = vshrl.u32 %v496, 7
        %v498 = vsub.s32 0, %v497
        %v499 = vrot.slane %v471, %v498
        %v500 = vlaneseq
        %v501 = vshrl.u32 %v500, 7
        %v502 = vsub.s32 2, %v501
        %v503 = vrot.slane %v471, %v502
        %v507 = vlaneseq
        %v508 = vshrl.u32 %v507, 7
        %v509 = vsub.s32 0, %v508
        %v510 = vrot.slane %v472, %v509
        %v511 = vlaneseq
        %v512 = vshrl.u32 %v511, 7
        %v513 = vsub.s32 2, %v512
        %v514 = vrot.slane %v472, %v513
        %v517 = vlaneseq
        %v518 = vshrl.u32 %v517, 7
        %v519 = vsub.s32 1, %v518
        %v520 = vrot.slane %v469, %v519
        %v521 = vlaneseq
        %v522 = vshrl.u32 %v521, 7
        %v523 = vsub.s32 3, %v522
        %v524 = vrot.slane %v469, %v523
        %v527 = vlaneseq
        %v528 = vshrl.u32 %v527, 7
        %v529 = vsub.s32 1, %v528
        %v530 = vrot.slane %v470, %v529
        %v531 = vlaneseq
        %v532 = vshrl.u32 %v531, 7
        %v533 = vsub.s32 3, %v532
        %v534 = vrot.slane %v470, %v533
        %v537 = vlaneseq
        %v538 = vshrl.u32 %v537, 7
        %v539 = vsub.s32 1, %v538
        %v540 = vrot.slane %v471, %v539
        %v541 = vlaneseq
        %v542 = vshrl.u32 %v541, 7
        %v543 = vsub.s32 3, %v542
        %v544 = vrot.slane %v471, %v543
        %v547 = vlaneseq
        %v548 = vshrl.u32 %v547, 7
        %v549 = vsub.s32 1, %v548
        %v550 = vrot.slane %v472, %v549
        %v551 = vlaneseq
        %v552 = vshrl.u32 %v551, 7
        %v553 = vsub.s32 3, %v552
        %v554 = vrot.slane %v472, %v553
        %vm557 = vcmask 1040384
        %v558 = vsel %vm557, %v477, %v488
        %v559 = vsel %vm557, %v481, %v492
        %vm560 = vcmask 1041408
        %v561 = vsel %vm560, %v558, %v499
        %v562 = vsel %vm560, %v559, %v503
        %vm563 = vcmask 1042432
        %v564 = vsel %vm563, %v561, %v510
        %v565 = vsel %vm563, %v562, %v514
        %vm566 = vcmask 1043456
        %v567 = vsel %vm566, %v564, %v520
        %v568 = vsel %vm566, %v565, %v524
        %vm569 = vcmask 1044480
        %v570 = vsel %vm569, %v567, %v530
        %v571 = vsel %vm569, %v568, %v534
        %vm572 = vcmask 1045504
        %v573 = vsel %vm572, %v570, %v540
        %v574 = vsel %vm572, %v571, %v544
        %vm575 = vcmask 1046528
        %v576 = vsel %vm575, %v573, %v550
        %v577 = vsel %vm575, %v574, %v554
        %v578 = vmul.f32 %v576, 3.1415927
        %v579 = vmul.f32 %v577, 3.1415927
        %v580 = vld [vmem:[%s439] sm:$0xff]
        %v581 = vld [vmem:[%s439 + $0x8] sm:$0xff]
        %v582 = vld [vmem:[%s439 + $0x10] sm:$0xff]
        %v583 = vld [vmem:[%s439 + $0x18] sm:$0xff]
        %v584 = vld [vmem:[%s444] sm:$0xff]
        %v585 = vld [vmem:[%s444 + $0x8] sm:$0xff]
        %v586 = vld [vmem:[%s444 + $0x10] sm:$0xff]
        %v587 = vld [vmem:[%s444 + $0x18] sm:$0xff]
        %v588 = vld [vmem:[%s449] sm:$0xff]
        %v589 = vld [vmem:[%s449 + $0x8] sm:$0xff]
        %v590 = vld [vmem:[%s449 + $0x10] sm:$0xff]
        %v591 = vld [vmem:[%s449 + $0x18] sm:$0xff]
        %v592 = vand.u32 2147483647, %v578
        %vm593 = vcmp.le.f32.partialorder %v592, 0.7853982
        %vm594 = vcmp.lt.s32.totalorder %v578, 0
        %v595 = vand.u32 %v578, 2139095040
        %v596 = vshrl.u32 %v595, 23
        %v597 = vsub.s32 %v596, 127
        %v598 = vand.u32 2147483647, %v578
        %v599 = vand.u32 %v598, 8388607
        %v600 = vor.u32 %v599, 8388608
        %v601 = vsub.s32 0, %v600
        %v602 = vadd.s32 %v597, 1
        %vm603 = vcmp.gt.s32.totalorder %v602, 0
        %v604 = vsel %vm603, %v602, 0
        %v605 = vshrl.u32 %v604, 5
        %v606 = vand.u32 %v604, 31
        %v607 = vsub.s32 32, %v606
        %v608 = vshrl.u32 683565275, %v607
        %v609 = vshll.u32 683565275, %v606
        %v610 = vshrl.u32 2475754826, %v607
        %v611 = vor.u32 %v609, %v610
        %v612 = vshll.u32 2475754826, %v606
        %v613 = vshrl.u32 2131351028, %v607
        %v614 = vor.u32 %v612, %v613
        %v615 = vshll.u32 2131351028, %v606
        %v616 = vshrl.u32 2102212464, %v607
        %v617 = vor.u32 %v615, %v616
        %v618 = vshll.u32 2102212464, %v606
        %v619 = vshrl.u32 920167782, %v607
        %v620 = vor.u32 %v618, %v619
        %v621 = vshll.u32 920167782, %v606
        %v622 = vshrl.u32 1326507024, %v607
        %v623 = vor.u32 %v621, %v622
        %vm624 = vcmp.lt.s32.totalorder %v605, 1
        %vm625 = vcmp.lt.s32.totalorder %v605, 2
        %vm626 = vcmp.lt.s32.totalorder %v605, 3
        %vm627 = vcmp.lt.s32.totalorder %v605, 4
        %v628 = vsel %vm624, %v608, %v611
        %v629 = vsel %vm627, %v617, 2102212464
        %v630 = vsel %vm626, %v614, %v629
        %v631 = vsel %vm625, %v628, %v630
        %v632 = vsel %vm624, %v611, %v614
        %v633 = vsel %vm627, %v620, 920167782
        %v634 = vsel %vm626, %v617, %v633
        %v635 = vsel %vm625, %v632, %v634
        %v636 = vsel %vm624, %v614, %v617
        %v637 = vsel %vm627, %v623, 1326507024
        %v638 = vsel %vm626, %v620, %v637
        %v639 = vsel %vm625, %v636, %v638
        %v640 = vshll.u32 %v600, 8
        %v641 = vmul.u32.u64.compose %v640, %v639
        %v642 = vextract.low.u32 %v641
        %v643 = vextract.high.u32 %v641
        %v644 = vmul.u32.u64.compose %v640, %v635
        %v645 = vextract.low.u32 %v644
        %v646 = vextract.high.u32 %v644
        %v647 = vmul.u32 %v640, %v631
        %v648 = vadd.s32 %v643, %v645
        %vm649 = vc.u32 %v643, %v645
        %v650 = vadd.s32 %v646, 1
        %v651 = vsel %vm649, %v650, %v646
        %v652 = vadd.s32 %v647, %v651
        %v653 = vadd.s32 %v652, 536870912
        %v654 = vshrl.u32 %v653, 30
        %v655 = vshll.u32 %v654, 30
        %v656 = vsub.s32 %v652, %v655
        %vm657 = vcmp.lt.s32.totalorder %v656, 0
        %v658 = vsub.s32 0, %v656
        %v659 = vsel %vm657, %v658, %v656
        %v660 = vclz %v659
        %v661 = vsub.s32 %v660, 2
        %vm662 = vcmp.gt.s32.totalorder 0, %v661
        %v663 = vsel %vm662, 0, %v661
        %v664 = vsub.s32 32, %v663
        %v665 = vshll.u32 %v656, %v663
        %v666 = vshrl.u32 %v648, %v664
        %v667 = vor.u32 %v665, %v666
        %v668 = vsub.s32 4294967266, %v663
        %v669 = vadd.s32 %v668, 127
        %v670 = vshll.u32 %v669, 23
        %v671 = vor.u32 4788187, %v670
        %v672 = vand.u32 2147483647, %v671
        %v674 = vcvt.s32.f32 %v667
        %v675 = vmul.f32 %v674, %v672
        %v676 = vxor.u32 %v675, 2147483648
        %v677 = vsel %vm594, %v676, %v675
        %v678 = vsub.s32 4, %v654
        %v679 = vsel %vm594, %v678, %v654
        %v680 = vsel %vm593, %v578, %v677
        %v681 = vsel %vm593, 0, %v679
        %v682 = vcosq.f32.pop %v680
        %v683 = vsinq.f32.pop %v680
        %vm684 = vweird.f32 %v578
        %v685 = vand.u32 %v681, 3
        %vm686 = vcmp.lt.s32.totalorder %v685, 2
        %vm687 = vcmp.eq.s32.totalorder %v685, 0
        %v688 = vxor.u32 %v683, 2147483648
        %v689 = vsel %vm687, %v682, %v688
        %vm690 = vcmp.eq.s32.totalorder %v685, 2
        %v691 = vxor.u32 %v682, 2147483648
        %v692 = vsel %vm690, %v691, %v683
        %v693 = vsel %vm686, %v689, %v692
        %v694 = vsel %vm684, nan, %v693
        %v695 = vand.u32 2147483647, %v579
        %vm696 = vcmp.le.f32.partialorder %v695, 0.7853982
        %vm697 = vcmp.lt.s32.totalorder %v579, 0
        %v698 = vand.u32 %v579, 2139095040
        %v699 = vshrl.u32 %v698, 23
        %v700 = vsub.s32 %v699, 127
        %v701 = vand.u32 2147483647, %v579
        %v702 = vand.u32 %v701, 8388607
        %v703 = vor.u32 %v702, 8388608
        %v704 = vsub.s32 0, %v703
        %v705 = vadd.s32 %v700, 1
        %vm706 = vcmp.gt.s32.totalorder %v705, 0
        %v707 = vsel %vm706, %v705, 0
        %v708 = vshrl.u32 %v707, 5
        %v709 = vand.u32 %v707, 31
        %v710 = vsub.s32 32, %v709
        %v711 = vshrl.u32 683565275, %v710
        %v712 = vshll.u32 683565275, %v709
        %v713 = vshrl.u32 2475754826, %v710
        %v714 = vor.u32 %v712, %v713
        %v715 = vshll.u32 2475754826, %v709
        %v716 = vshrl.u32 2131351028, %v710
        %v717 = vor.u32 %v715, %v716
        %v718 = vshll.u32 2131351028, %v709
        %v719 = vshrl.u32 2102212464, %v710
        %v720 = vor.u32 %v718, %v719
        %v721 = vshll.u32 2102212464, %v709
        %v722 = vshrl.u32 920167782, %v710
        %v723 = vor.u32 %v721, %v722
        %v724 = vshll.u32 920167782, %v709
        %v725 = vshrl.u32 1326507024, %v710
        %v726 = vor.u32 %v724, %v725
        %vm727 = vcmp.lt.s32.totalorder %v708, 1
        %vm728 = vcmp.lt.s32.totalorder %v708, 2
        %vm729 = vcmp.lt.s32.totalorder %v708, 3
        %vm730 = vcmp.lt.s32.totalorder %v708, 4
        %v731 = vsel %vm727, %v711, %v714
        %v732 = vsel %vm730, %v720, 2102212464
        %v733 = vsel %vm729, %v717, %v732
        %v734 = vsel %vm728, %v731, %v733
        %v735 = vsel %vm727, %v714, %v717
        %v736 = vsel %vm730, %v723, 920167782
        %v737 = vsel %vm729, %v720, %v736
        %v738 = vsel %vm728, %v735, %v737
        %v739 = vsel %vm727, %v717, %v720
        %v740 = vsel %vm730, %v726, 1326507024
        %v741 = vsel %vm729, %v723, %v740
        %v742 = vsel %vm728, %v739, %v741
        %v743 = vshll.u32 %v703, 8
        %v744 = vmul.u32.u64.compose %v743, %v742
        %v745 = vextract.low.u32 %v744
        %v746 = vextract.high.u32 %v744
        %v747 = vmul.u32.u64.compose %v743, %v738
        %v748 = vextract.low.u32 %v747
        %v749 = vextract.high.u32 %v747
        %v750 = vmul.u32 %v743, %v734
        %v751 = vadd.s32 %v746, %v748
        %vm752 = vc.u32 %v746, %v748
        %v753 = vadd.s32 %v749, 1
        %v754 = vsel %vm752, %v753, %v749
        %v755 = vadd.s32 %v750, %v754
        %v756 = vadd.s32 %v755, 536870912
        %v757 = vshrl.u32 %v756, 30
        %v758 = vshll.u32 %v757, 30
        %v759 = vsub.s32 %v755, %v758
        %vm760 = vcmp.lt.s32.totalorder %v759, 0
        %v761 = vsub.s32 0, %v759
        %v762 = vsel %vm760, %v761, %v759
        %v763 = vclz %v762
        %v764 = vsub.s32 %v763, 2
        %vm765 = vcmp.gt.s32.totalorder 0, %v764
        %v766 = vsel %vm765, 0, %v764
        %v767 = vsub.s32 32, %v766
        %v768 = vshll.u32 %v759, %v766
        %v769 = vshrl.u32 %v751, %v767
        %v770 = vor.u32 %v768, %v769
        %v771 = vsub.s32 4294967266, %v766
        %v772 = vadd.s32 %v771, 127
        %v773 = vshll.u32 %v772, 23
        %v774 = vor.u32 4788187, %v773
        %v775 = vand.u32 2147483647, %v774
        %v777 = vcvt.s32.f32 %v770
        %v778 = vmul.f32 %v777, %v775
        %v779 = vxor.u32 %v778, 2147483648
        %v780 = vsel %vm697, %v779, %v778
        %v781 = vsub.s32 4, %v757
        %v782 = vsel %vm697, %v781, %v757
        %v783 = vsel %vm696, %v579, %v780
        %v784 = vsel %vm696, 0, %v782
        %v785 = vcosq.f32.pop %v783
        %v786 = vsinq.f32.pop %v783
        %vm787 = vweird.f32 %v579
        %v788 = vand.u32 %v784, 3
        %vm789 = vcmp.lt.s32.totalorder %v788, 2
        %vm790 = vcmp.eq.s32.totalorder %v788, 0
        %v791 = vxor.u32 %v786, 2147483648
        %v792 = vsel %vm790, %v785, %v791
        %vm793 = vcmp.eq.s32.totalorder %v788, 2
        %v794 = vxor.u32 %v785, 2147483648
        %v795 = vsel %vm793, %v794, %v786
        %v796 = vsel %vm789, %v792, %v795
        %v797 = vsel %vm787, nan, %v796
        %v798 = vand.u32 2147483647, %v578
        %vm799 = vcmp.le.f32.partialorder %v798, 0.7853982
        %vm800 = vcmp.lt.s32.totalorder %v578, 0
        %v801 = vand.u32 %v578, 2139095040
        %v802 = vshrl.u32 %v801, 23
        %v803 = vsub.s32 %v802, 127
        %v804 = vand.u32 2147483647, %v578
        %v805 = vand.u32 %v804, 8388607
        %v806 = vor.u32 %v805, 8388608
        %v807 = vsub.s32 0, %v806
        %v808 = vadd.s32 %v803, 1
        %vm809 = vcmp.gt.s32.totalorder %v808, 0
        %v810 = vsel %vm809, %v808, 0
        %v811 = vshrl.u32 %v810, 5
        %v812 = vand.u32 %v810, 31
        %v813 = vsub.s32 32, %v812
        %v814 = vshrl.u32 683565275, %v813
        %v815 = vshll.u32 683565275, %v812
        %v816 = vshrl.u32 2475754826, %v813
        %v817 = vor.u32 %v815, %v816
        %v818 = vshll.u32 2475754826, %v812
        %v819 = vshrl.u32 2131351028, %v813
        %v820 = vor.u32 %v818, %v819
        %v821 = vshll.u32 2131351028, %v812
        %v822 = vshrl.u32 2102212464, %v813
        %v823 = vor.u32 %v821, %v822
        %v824 = vshll.u32 2102212464, %v812
        %v825 = vshrl.u32 920167782, %v813
        %v826 = vor.u32 %v824, %v825
        %v827 = vshll.u32 920167782, %v812
        %v828 = vshrl.u32 1326507024, %v813
        %v829 = vor.u32 %v827, %v828
        %vm830 = vcmp.lt.s32.totalorder %v811, 1
        %vm831 = vcmp.lt.s32.totalorder %v811, 2
        %vm832 = vcmp.lt.s32.totalorder %v811, 3
        %vm833 = vcmp.lt.s32.totalorder %v811, 4
        %v834 = vsel %vm830, %v814, %v817
        %v835 = vsel %vm833, %v823, 2102212464
        %v836 = vsel %vm832, %v820, %v835
        %v837 = vsel %vm831, %v834, %v836
        %v838 = vsel %vm830, %v817, %v820
        %v839 = vsel %vm833, %v826, 920167782
        %v840 = vsel %vm832, %v823, %v839
        %v841 = vsel %vm831, %v838, %v840
        %v842 = vsel %vm830, %v820, %v823
        %v843 = vsel %vm833, %v829, 1326507024
        %v844 = vsel %vm832, %v826, %v843
        %v845 = vsel %vm831, %v842, %v844
        %v846 = vshll.u32 %v806, 8
        %v847 = vmul.u32.u64.compose %v846, %v845
        %v848 = vextract.low.u32 %v847
        %v849 = vextract.high.u32 %v847
        %v850 = vmul.u32.u64.compose %v846, %v841
        %v851 = vextract.low.u32 %v850
        %v852 = vextract.high.u32 %v850
        %v853 = vmul.u32 %v846, %v837
        %v854 = vadd.s32 %v849, %v851
        %vm855 = vc.u32 %v849, %v851
        %v856 = vadd.s32 %v852, 1
        %v857 = vsel %vm855, %v856, %v852
        %v858 = vadd.s32 %v853, %v857
        %v859 = vadd.s32 %v858, 536870912
        %v860 = vshrl.u32 %v859, 30
        %v861 = vshll.u32 %v860, 30
        %v862 = vsub.s32 %v858, %v861
        %vm863 = vcmp.lt.s32.totalorder %v862, 0
        %v864 = vsub.s32 0, %v862
        %v865 = vsel %vm863, %v864, %v862
        %v866 = vclz %v865
        %v867 = vsub.s32 %v866, 2
        %vm868 = vcmp.gt.s32.totalorder 0, %v867
        %v869 = vsel %vm868, 0, %v867
        %v870 = vsub.s32 32, %v869
        %v871 = vshll.u32 %v862, %v869
        %v872 = vshrl.u32 %v854, %v870
        %v873 = vor.u32 %v871, %v872
        %v874 = vsub.s32 4294967266, %v869
        %v875 = vadd.s32 %v874, 127
        %v876 = vshll.u32 %v875, 23
        %v877 = vor.u32 4788187, %v876
        %v878 = vand.u32 2147483647, %v877
        %v880 = vcvt.s32.f32 %v873
        %v881 = vmul.f32 %v880, %v878
        %v882 = vxor.u32 %v881, 2147483648
        %v883 = vsel %vm800, %v882, %v881
        %v884 = vsub.s32 4, %v860
        %v885 = vsel %vm800, %v884, %v860
        %v886 = vsel %vm799, %v578, %v883
        %v887 = vsel %vm799, 0, %v885
        %v888 = vcosq.f32.pop %v886
        %v889 = vsinq.f32.pop %v886
        %vm890 = vweird.f32 %v578
        %v891 = vadd.s32 %v887, 3
        %v892 = vand.u32 %v891, 3
        %vm893 = vcmp.lt.s32.totalorder %v892, 2
        %vm894 = vcmp.eq.s32.totalorder %v892, 0
        %v895 = vxor.u32 %v889, 2147483648
        %v896 = vsel %vm894, %v888, %v895
        %vm897 = vcmp.eq.s32.totalorder %v892, 2
        %v898 = vxor.u32 %v888, 2147483648
        %v899 = vsel %vm897, %v898, %v889
        %v900 = vsel %vm893, %v896, %v899
        %v901 = vsel %vm890, nan, %v900
        %v902 = vand.u32 2147483647, %v579
        %vm903 = vcmp.le.f32.partialorder %v902, 0.7853982
        %vm904 = vcmp.lt.s32.totalorder %v579, 0
        %v905 = vand.u32 %v579, 2139095040
        %v906 = vshrl.u32 %v905, 23
        %v907 = vsub.s32 %v906, 127
        %v908 = vand.u32 2147483647, %v579
        %v909 = vand.u32 %v908, 8388607
        %v910 = vor.u32 %v909, 8388608
        %v911 = vsub.s32 0, %v910
        %v912 = vadd.s32 %v907, 1
        %vm913 = vcmp.gt.s32.totalorder %v912, 0
        %v914 = vsel %vm913, %v912, 0
        %v915 = vshrl.u32 %v914, 5
        %v916 = vand.u32 %v914, 31
        %v917 = vsub.s32 32, %v916
        %v918 = vshrl.u32 683565275, %v917
        %v919 = vshll.u32 683565275, %v916
        %v920 = vshrl.u32 2475754826, %v917
        %v921 = vor.u32 %v919, %v920
        %v922 = vshll.u32 2475754826, %v916
        %v923 = vshrl.u32 2131351028, %v917
        %v924 = vor.u32 %v922, %v923
        %v925 = vshll.u32 2131351028, %v916
        %v926 = vshrl.u32 2102212464, %v917
        %v927 = vor.u32 %v925, %v926
        %v928 = vshll.u32 2102212464, %v916
        %v929 = vshrl.u32 920167782, %v917
        %v930 = vor.u32 %v928, %v929
        %v931 = vshll.u32 920167782, %v916
        %v932 = vshrl.u32 1326507024, %v917
        %v933 = vor.u32 %v931, %v932
        %vm934 = vcmp.lt.s32.totalorder %v915, 1
        %vm935 = vcmp.lt.s32.totalorder %v915, 2
        %vm936 = vcmp.lt.s32.totalorder %v915, 3
        %vm937 = vcmp.lt.s32.totalorder %v915, 4
        %v938 = vsel %vm934, %v918, %v921
        %v939 = vsel %vm937, %v927, 2102212464
        %v940 = vsel %vm936, %v924, %v939
        %v941 = vsel %vm935, %v938, %v940
        %v942 = vsel %vm934, %v921, %v924
        %v943 = vsel %vm937, %v930, 920167782
        %v944 = vsel %vm936, %v927, %v943
        %v945 = vsel %vm935, %v942, %v944
        %v946 = vsel %vm934, %v924, %v927
        %v947 = vsel %vm937, %v933, 1326507024
        %v948 = vsel %vm936, %v930, %v947
        %v949 = vsel %vm935, %v946, %v948
        %v950 = vshll.u32 %v910, 8
        %v951 = vmul.u32.u64.compose %v950, %v949
        %v952 = vextract.low.u32 %v951
        %v953 = vextract.high.u32 %v951
        %v954 = vmul.u32.u64.compose %v950, %v945
        %v955 = vextract.low.u32 %v954
        %v956 = vextract.high.u32 %v954
        %v957 = vmul.u32 %v950, %v941
        %v958 = vadd.s32 %v953, %v955
        %vm959 = vc.u32 %v953, %v955
        %v960 = vadd.s32 %v956, 1
        %v961 = vsel %vm959, %v960, %v956
        %v962 = vadd.s32 %v957, %v961
        %v963 = vadd.s32 %v962, 536870912
        %v964 = vshrl.u32 %v963, 30
        %v965 = vshll.u32 %v964, 30
        %v966 = vsub.s32 %v962, %v965
        %vm967 = vcmp.lt.s32.totalorder %v966, 0
        %v968 = vsub.s32 0, %v966
        %v969 = vsel %vm967, %v968, %v966
        %v970 = vclz %v969
        %v971 = vsub.s32 %v970, 2
        %vm972 = vcmp.gt.s32.totalorder 0, %v971
        %v973 = vsel %vm972, 0, %v971
        %v974 = vsub.s32 32, %v973
        %v975 = vshll.u32 %v966, %v973
        %v976 = vshrl.u32 %v958, %v974
        %v977 = vor.u32 %v975, %v976
        %v978 = vsub.s32 4294967266, %v973
        %v979 = vadd.s32 %v978, 127
        %v980 = vshll.u32 %v979, 23
        %v981 = vor.u32 4788187, %v980
        %v982 = vand.u32 2147483647, %v981
        %v984 = vcvt.s32.f32 %v977
        %v985 = vmul.f32 %v984, %v982
        %v986 = vxor.u32 %v985, 2147483648
        %v987 = vsel %vm904, %v986, %v985
        %v988 = vsub.s32 4, %v964
        %v989 = vsel %vm904, %v988, %v964
        %v990 = vsel %vm903, %v579, %v987
        %v991 = vsel %vm903, 0, %v989
        %v992 = vcosq.f32.pop %v990
        %v993 = vsinq.f32.pop %v990
        %vm994 = vweird.f32 %v579
        %v995 = vadd.s32 %v991, 3
        %v996 = vand.u32 %v995, 3
        %vm997 = vcmp.lt.s32.totalorder %v996, 2
        %vm998 = vcmp.eq.s32.totalorder %v996, 0
        %v999 = vxor.u32 %v993, 2147483648
        %v1000 = vsel %vm998, %v992, %v999
        %vm1001 = vcmp.eq.s32.totalorder %v996, 2
        %v1002 = vxor.u32 %v992, 2147483648
        %v1003 = vsel %vm1001, %v1002, %v993
        %v1004 = vsel %vm997, %v1000, %v1003
        %v1005 = vsel %vm994, nan, %v1004
        %vm1006 = vcmask 64512
        %v1008 = vsel %vm1006, %v584, 0
        %v1011 = vsel %vm1006, %v585, 0
        %v1014 = vsel %vm1006, %v586, 0
        %v1017 = vsel %vm1006, %v587, 0
        %1019 = vmatprep.subr.mxu0 %v1005
        %1020 = vmatpush1.msra.mxu0 %v901
        %1021 = vmatprep.subr.mxu0 0.0
        %1022 = vmatpush1.msra.mxu0 0.0
        %1023 = vmatprep.subr.mxu0 0.0
        %1024 = vmatpush1.msra.mxu0 0.0
        %1025 = vmatprep.subr.mxu0 0.0
        %1026 = vmatpush1.msra.mxu0 0.0
        %1027 = vmatprep.subr.mxu0 0.0
        %1028 = vmatpush1.msra.mxu0 0.0
        %1029 = vmatprep.subr.mxu0 0.0
        %1030 = vmatpush1.msra.mxu0 0.0
        %1031 = vmatprep.subr.mxu0 0.0
        %1032 = vmatpush1.msra.mxu0 0.0
        %1033 = vmatprep.subr.mxu0 0.0
        %1034 = vmatpush1.msra.mxu0 0.0
        %1035 = vmatprep.subr.mxu0 0.0
        %1036 = vmatpush1.msra.mxu0 0.0
        %1037 = vmatprep.subr.mxu0 0.0
        %1038 = vmatpush1.msra.mxu0 0.0
        %1039 = vmatprep.subr.mxu0 0.0
        %1040 = vmatpush1.msra.mxu0 0.0
        %1041 = vmatprep.subr.mxu0 0.0
        %1042 = vmatpush1.msra.mxu0 0.0
        %1043 = vmatprep.subr.mxu0 0.0
        %1044 = vmatpush1.msra.mxu0 0.0
        %1045 = vmatprep.subr.mxu0 0.0
        %1046 = vmatpush1.msra.mxu0 0.0
        %1047 = vmatprep.subr.mxu0 0.0
        %1048 = vmatpush1.msra.mxu0 0.0
        %1049 = vmatprep.subr.mxu0 0.0
        %1050 = vmatpush1.msra.mxu0 0.0
        %1051 = vmatprep.subr.mxu0 0.0
        %1052 = vmatpush1.msra.mxu0 0.0
        %1053 = vmatprep.subr.mxu0 0.0
        %1054 = vmatpush1.msra.mxu0 0.0
        %1055 = vmatprep.subr.mxu0 0.0
        %1056 = vmatpush1.msra.mxu0 0.0
        %1057 = vmatprep.subr.mxu0 0.0
        %1058 = vmatpush1.msra.mxu0 0.0
        %1059 = vmatprep.subr.mxu0 0.0
        %1060 = vmatpush1.msra.mxu0 0.0
        %1061 = vmatprep.subr.mxu0 0.0
        %1062 = vmatpush1.msra.mxu0 0.0
        %1063 = vmatprep.subr.mxu0 0.0
        %1064 = vmatpush1.msra.mxu0 0.0
        %1065 = vmatprep.subr.mxu0 0.0
        %1066 = vmatpush1.msra.mxu0 0.0
        %1067 = vmatprep.subr.mxu0 0.0
        %1068 = vmatpush1.msra.mxu0 0.0
        %1069 = vmatprep.subr.mxu0 0.0
        %1070 = vmatpush1.msra.mxu0 0.0
        %1071 = vmatprep.subr.mxu0 0.0
        %1072 = vmatpush1.msra.mxu0 0.0
        %1073 = vmatprep.subr.mxu0 0.0
        %1074 = vmatpush1.msra.mxu0 0.0
        %1075 = vmatprep.subr.mxu0 0.0
        %1076 = vmatpush1.msra.mxu0 0.0
        %1077 = vmatprep.subr.mxu0 0.0
        %1078 = vmatpush1.msra.mxu0 0.0
        %1079 = vmatprep.subr.mxu0 0.0
        %1080 = vmatpush1.msra.mxu0 0.0
        %1081 = vmatprep.subr.mxu0 0.0
        %1082 = vmatpush1.msra.mxu0 0.0
        %1083 = vmatprep.mubr.f32.mxu0 0.0
        %1084 = vmatmul.mubr.f32.gmra.mrb[0].mxu0 %v1008
        %v1085 = vpop.f32.mrb[0].mxu0
        %v1086 = vadd.f32 0.0, %v1085
        %v1087 = vpop.f32.mrb[0].mxu0
        %v1088 = vadd.f32 0.0, %v1087
        %1089 = vmatprep.mubr.f32.mxu0 0.0
        %1090 = vmatmul.mubr.f32.gmra.mrb[0].mxu0 %v1011
        %v1091 = vpop.f32.mrb[0].mxu0
        %v1092 = vadd.f32 0.0, %v1091
        %v1093 = vpop.f32.mrb[0].mxu0
        %v1094 = vadd.f32 0.0, %v1093
        %1095 = vmatprep.mubr.f32.mxu0 0.0
        %1096 = vmatmul.mubr.f32.gmra.mrb[0].mxu0 %v1014
        %v1097 = vpop.f32.mrb[0].mxu0
        %v1098 = vadd.f32 0.0, %v1097
        %v1099 = vpop.f32.mrb[0].mxu0
        %v1100 = vadd.f32 0.0, %v1099
        %1101 = vmatprep.mubr.f32.mxu0 0.0
        %1102 = vmatmul.mubr.f32.gmra.mrb[0].mxu0 %v1017
        %v1103 = vpop.f32.mrb[0].mxu0
        %v1104 = vadd.f32 0.0, %v1103
        %v1105 = vpop.f32.mrb[0].mxu0
        %v1106 = vadd.f32 0.0, %v1105
        %1107 = vdwg.mxu0
        %v1109 = vsel %vm1006, %v580, 0
        %v1112 = vsel %vm1006, %v581, 0
        %v1115 = vsel %vm1006, %v582, 0
        %v1118 = vsel %vm1006, %v583, 0
        %1120 = vmatprep.subr.mxu0 %v797
        %1121 = vmatpush1.msra.mxu0 %v694
        %1122 = vmatprep.subr.mxu0 0.0
        %1123 = vmatpush1.msra.mxu0 0.0
        %1124 = vmatprep.subr.mxu0 0.0
        %1125 = vmatpush1.msra.mxu0 0.0
        %1126 = vmatprep.subr.mxu0 0.0
        %1127 = vmatpush1.msra.mxu0 0.0
        %1128 = vmatprep.subr.mxu0 0.0
        %1129 = vmatpush1.msra.mxu0 0.0
        %1130 = vmatprep.subr.mxu0 0.0
        %1131 = vmatpush1.msra.mxu0 0.0
        %1132 = vmatprep.subr.mxu0 0.0
        %1133 = vmatpush1.msra.mxu0 0.0
        %1134 = vmatprep.subr.mxu0 0.0
        %1135 = vmatpush1.msra.mxu0 0.0
        %1136 = vmatprep.subr.mxu0 0.0
        %1137 = vmatpush1.msra.mxu0 0.0
        %1138 = vmatprep.subr.mxu0 0.0
        %1139 = vmatpush1.msra.mxu0 0.0
        %1140 = vmatprep.subr.mxu0 0.0
        %1141 = vmatpush1.msra.mxu0 0.0
        %1142 = vmatprep.subr.mxu0 0.0
        %1143 = vmatpush1.msra.mxu0 0.0
        %1144 = vmatprep.subr.mxu0 0.0
        %1145 = vmatpush1.msra.mxu0 0.0
        %1146 = vmatprep.subr.mxu0 0.0
        %1147 = vmatpush1.msra.mxu0 0.0
        %1148 = vmatprep.subr.mxu0 0.0
        %1149 = vmatpush1.msra.mxu0 0.0
        %1150 = vmatprep.subr.mxu0 0.0
        %1151 = vmatpush1.msra.mxu0 0.0
        %1152 = vmatprep.subr.mxu0 0.0
        %1153 = vmatpush1.msra.mxu0 0.0
        %1154 = vmatprep.subr.mxu0 0.0
        %1155 = vmatpush1.msra.mxu0 0.0
        %1156 = vmatprep.subr.mxu0 0.0
        %1157 = vmatpush1.msra.mxu0 0.0
        %1158 = vmatprep.subr.mxu0 0.0
        %1159 = vmatpush1.msra.mxu0 0.0
        %1160 = vmatprep.subr.mxu0 0.0
        %1161 = vmatpush1.msra.mxu0 0.0
        %1162 = vmatprep.subr.mxu0 0.0
        %1163 = vmatpush1.msra.mxu0 0.0
        %1164 = vmatprep.subr.mxu0 0.0
        %1165 = vmatpush1.msra.mxu0 0.0
        %1166 = vmatprep.subr.mxu0 0.0
        %1167 = vmatpush1.msra.mxu0 0.0
        %1168 = vmatprep.subr.mxu0 0.0
        %1169 = vmatpush1.msra.mxu0 0.0
        %1170 = vmatprep.subr.mxu0 0.0
        %1171 = vmatpush1.msra.mxu0 0.0
        %1172 = vmatprep.subr.mxu0 0.0
        %1173 = vmatpush1.msra.mxu0 0.0
        %1174 = vmatprep.subr.mxu0 0.0
        %1175 = vmatpush1.msra.mxu0 0.0
        %1176 = vmatprep.subr.mxu0 0.0
        %1177 = vmatpush1.msra.mxu0 0.0
        %1178 = vmatprep.subr.mxu0 0.0
        %1179 = vmatpush1.msra.mxu0 0.0
        %1180 = vmatprep.subr.mxu0 0.0
        %1181 = vmatpush1.msra.mxu0 0.0
        %1182 = vmatprep.subr.mxu0 0.0
        %1183 = vmatpush1.msra.mxu0 0.0
        %1184 = vmatprep.mubr.f32.mxu0 0.0
        %1185 = vmatmul.mubr.f32.gmra.mrb[0].mxu0 %v1109
        %v1186 = vpop.f32.mrb[0].mxu0
        %v1187 = vadd.f32 %v1086, %v1186
        %v1188 = vpop.f32.mrb[0].mxu0
        %v1189 = vadd.f32 %v1088, %v1188
        %1190 = vmatprep.mubr.f32.mxu0 0.0
        %1191 = vmatmul.mubr.f32.gmra.mrb[0].mxu0 %v1112
        %v1192 = vpop.f32.mrb[0].mxu0
        %v1193 = vadd.f32 %v1092, %v1192
        %v1194 = vpop.f32.mrb[0].mxu0
        %v1195 = vadd.f32 %v1094, %v1194
        %1196 = vmatprep.mubr.f32.mxu0 0.0
        %1197 = vmatmul.mubr.f32.gmra.mrb[0].mxu0 %v1115
        %v1198 = vpop.f32.mrb[0].mxu0
        %v1199 = vadd.f32 %v1098, %v1198
        %v1200 = vpop.f32.mrb[0].mxu0
        %v1201 = vadd.f32 %v1100, %v1200
        %1202 = vmatprep.mubr.f32.mxu0 0.0
        %1203 = vmatmul.mubr.f32.gmra.mrb[0].mxu0 %v1118
        %v1204 = vpop.f32.mrb[0].mxu0
        %v1205 = vadd.f32 %v1104, %v1204
        %v1206 = vpop.f32.mrb[0].mxu0
        %v1207 = vadd.f32 %v1106, %v1206
        %1208 = vdwg.mxu0
        %1210 = vset.pattern.permute.xlu0 0
        %1211 = vperm.xlu0 %1210, %v588
        %v1212 = vpop.permute.xlu0 %1211
        %1215 = vset.pattern.permute.xlu0 0
        %1216 = vperm.xlu0 %1215, %v589
        %v1217 = vpop.permute.xlu0 %1216
        %1220 = vset.pattern.permute.xlu0 0
        %1221 = vperm.xlu0 %1220, %v590
        %v1222 = vpop.permute.xlu0 %1221
        %1225 = vset.pattern.permute.xlu0 0
        %1226 = vperm.xlu0 %1225, %v591
        %v1227 = vpop.permute.xlu0 %1226
        %v1229 = vadd.f32 %v1187, %v1212
        %v1230 = vadd.f32 %v1189, %v1212
        %v1231 = vadd.f32 %v1193, %v1217
        %v1232 = vadd.f32 %v1195, %v1217
        %v1233 = vadd.f32 %v1199, %v1222
        %v1234 = vadd.f32 %v1201, %v1222
        %v1235 = vadd.f32 %v1205, %v1227
        %v1236 = vadd.f32 %v1207, %v1227
        %v1237 = vmax.f32 %v1229, 0.0
        %v1238 = vmax.f32 %v1230, 0.0
        %v1239 = vmax.f32 %v1231, 0.0
        %v1240 = vmax.f32 %v1232, 0.0
        %v1241 = vmax.f32 %v1233, 0.0
        %v1242 = vmax.f32 %v1234, 0.0
        %v1243 = vmax.f32 %v1235, 0.0
        %v1244 = vmax.f32 %v1236, 0.0
        %v1245 = vld [vmem:[%s454] sm:$0xff]
        %v1246 = vld [vmem:[%s454 + $0x8] sm:$0xff]
        %v1247 = vld [vmem:[%s454 + $0x10] sm:$0xff]
        %v1248 = vld [vmem:[%s454 + $0x18] sm:$0xff]
        %v1249 = vld [vmem:[%s459] sm:$0xff]
        %v1250 = vld [vmem:[%s459 + $0x8] sm:$0xff]
        %v1251 = vld [vmem:[%s459 + $0x10] sm:$0xff]
        %v1252 = vld [vmem:[%s459 + $0x18] sm:$0xff]
        %1254 = vset.pattern.permute.xlu0 0
        %1255 = vperm.xlu0 %1254, %v1249
        %v1256 = vpop.permute.xlu0 %1255
        %1259 = vset.pattern.permute.xlu0 0
        %1260 = vperm.xlu0 %1259, %v1250
        %v1261 = vpop.permute.xlu0 %1260
        %1264 = vset.pattern.permute.xlu0 0
        %1265 = vperm.xlu0 %1264, %v1251
        %v1266 = vpop.permute.xlu0 %1265
        %1269 = vset.pattern.permute.xlu0 0
        %1270 = vperm.xlu0 %1269, %v1252
        %v1271 = vpop.permute.xlu0 %1270
        %vm1273 = vcmask 261120
        %v1275 = vsel %vm1273, %v1245, 0
        %v1278 = vsel %vm1273, %v1246, 0
        %v1281 = vsel %vm1273, %v1247, 0
        %v1284 = vsel %vm1273, %v1248, 0
        %1286 = vmatprep.subr.mxu0 %v1238
        %1287 = vmatpush1.msra.mxu0 %v1237
        %1288 = vmatprep.subr.mxu0 %v1240
        %1289 = vmatpush1.msra.mxu0 %v1239
        %1290 = vmatprep.subr.mxu0 %v1242
        %1291 = vmatpush1.msra.mxu0 %v1241
        %1292 = vmatprep.subr.mxu0 %v1244
        %1293 = vmatpush1.msra.mxu0 %v1243
        %1294 = vmatprep.subr.mxu0 0.0
        %1295 = vmatpush1.msra.mxu0 0.0
        %1296 = vmatprep.subr.mxu0 0.0
        %1297 = vmatpush1.msra.mxu0 0.0
        %1298 = vmatprep.subr.mxu0 0.0
        %1299 = vmatpush1.msra.mxu0 0.0
        %1300 = vmatprep.subr.mxu0 0.0
        %1301 = vmatpush1.msra.mxu0 0.0
        %1302 = vmatprep.subr.mxu0 0.0
        %1303 = vmatpush1.msra.mxu0 0.0
        %1304 = vmatprep.subr.mxu0 0.0
        %1305 = vmatpush1.msra.mxu0 0.0
        %1306 = vmatprep.subr.mxu0 0.0
        %1307 = vmatpush1.msra.mxu0 0.0
        %1308 = vmatprep.subr.mxu0 0.0
        %1309 = vmatpush1.msra.mxu0 0.0
        %1310 = vmatprep.subr.mxu0 0.0
        %1311 = vmatpush1.msra.mxu0 0.0
        %1312 = vmatprep.subr.mxu0 0.0
        %1313 = vmatpush1.msra.mxu0 0.0
        %1314 = vmatprep.subr.mxu0 0.0
        %1315 = vmatpush1.msra.mxu0 0.0
        %1316 = vmatprep.subr.mxu0 0.0
        %1317 = vmatpush1.msra.mxu0 0.0
        %1318 = vmatprep.subr.mxu0 0.0
        %1319 = vmatpush1.msra.mxu0 0.0
        %1320 = vmatprep.subr.mxu0 0.0
        %1321 = vmatpush1.msra.mxu0 0.0
        %1322 = vmatprep.subr.mxu0 0.0
        %1323 = vmatpush1.msra.mxu0 0.0
        %1324 = vmatprep.subr.mxu0 0.0
        %1325 = vmatpush1.msra.mxu0 0.0
        %1326 = vmatprep.subr.mxu0 0.0
        %1327 = vmatpush1.msra.mxu0 0.0
        %1328 = vmatprep.subr.mxu0 0.0
        %1329 = vmatpush1.msra.mxu0 0.0
        %1330 = vmatprep.subr.mxu0 0.0
        %1331 = vmatpush1.msra.mxu0 0.0
        %1332 = vmatprep.subr.mxu0 0.0
        %1333 = vmatpush1.msra.mxu0 0.0
        %1334 = vmatprep.subr.mxu0 0.0
        %1335 = vmatpush1.msra.mxu0 0.0
        %1336 = vmatprep.subr.mxu0 0.0
        %1337 = vmatpush1.msra.mxu0 0.0
        %1338 = vmatprep.subr.mxu0 0.0
        %1339 = vmatpush1.msra.mxu0 0.0
        %1340 = vmatprep.subr.mxu0 0.0
        %1341 = vmatpush1.msra.mxu0 0.0
        %1342 = vmatprep.subr.mxu0 0.0
        %1343 = vmatpush1.msra.mxu0 0.0
        %1344 = vmatprep.subr.mxu0 0.0
        %1345 = vmatpush1.msra.mxu0 0.0
        %1346 = vmatprep.subr.mxu0 0.0
        %1347 = vmatpush1.msra.mxu0 0.0
        %1348 = vmatprep.subr.mxu0 0.0
        %1349 = vmatpush1.msra.mxu0 0.0
        %1350 = vmatprep.mubr.f32.mxu0 0.0
        %1351 = vmatmul.mubr.f32.gmra.mrb[0].mxu0 %v1275
        %v1352 = vpop.f32.mrb[0].mxu0
        %v1353 = vadd.f32 %v1256, %v1352
        %v1354 = vpop.f32.mrb[0].mxu0
        %v1355 = vadd.f32 %v1256, %v1354
        %1356 = vmatprep.mubr.f32.mxu0 0.0
        %1357 = vmatmul.mubr.f32.gmra.mrb[0].mxu0 %v1278
        %v1358 = vpop.f32.mrb[0].mxu0
        %v1359 = vadd.f32 %v1261, %v1358
        %v1360 = vpop.f32.mrb[0].mxu0
        %v1361 = vadd.f32 %v1261, %v1360
        %1362 = vmatprep.mubr.f32.mxu0 0.0
        %1363 = vmatmul.mubr.f32.gmra.mrb[0].mxu0 %v1281
        %v1364 = vpop.f32.mrb[0].mxu0
        %v1365 = vadd.f32 %v1266, %v1364
        %v1366 = vpop.f32.mrb[0].mxu0
        %v1367 = vadd.f32 %v1266, %v1366
        %1368 = vmatprep.mubr.f32.mxu0 0.0
        %1369 = vmatmul.mubr.f32.gmra.mrb[0].mxu0 %v1284
        %v1370 = vpop.f32.mrb[0].mxu0
        %v1371 = vadd.f32 %v1271, %v1370
        %v1372 = vpop.f32.mrb[0].mxu0
        %v1373 = vadd.f32 %v1271, %v1372
        %1374 = vdwg.mxu0
        %v1375 = vmax.f32 %v1353, 0.0
        %v1376 = vmax.f32 %v1355, 0.0
        %v1377 = vmax.f32 %v1359, 0.0
        %v1378 = vmax.f32 %v1361, 0.0
        %v1379 = vmax.f32 %v1365, 0.0
        %v1380 = vmax.f32 %v1367, 0.0
        %v1381 = vmax.f32 %v1371, 0.0
        %v1382 = vmax.f32 %v1373, 0.0
        %v1383 = vld [vmem:[%s463] sm:$0xf]
        %v1384 = vld [vmem:[%s467] sm:$0xf]
        %1386 = vset.pattern.permute.xlu0 0
        %1387 = vperm.xlu0 %1386, %v1384
        %v1388 = vpop.permute.xlu0 %1387
        %v1391 = vsel %vm1273, %v1383, 0
        %1393 = vmatprep.subr.mxu0 %v1376
        %1394 = vmatpush1.msra.mxu0 %v1375
        %1395 = vmatprep.subr.mxu0 %v1378
        %1396 = vmatpush1.msra.mxu0 %v1377
        %1397 = vmatprep.subr.mxu0 %v1380
        %1398 = vmatpush1.msra.mxu0 %v1379
        %1399 = vmatprep.subr.mxu0 %v1382
        %1400 = vmatpush1.msra.mxu0 %v1381
        %1401 = vmatprep.subr.mxu0 0.0
        %1402 = vmatpush1.msra.mxu0 0.0
        %1403 = vmatprep.subr.mxu0 0.0
        %1404 = vmatpush1.msra.mxu0 0.0
        %1405 = vmatprep.subr.mxu0 0.0
        %1406 = vmatpush1.msra.mxu0 0.0
        %1407 = vmatprep.subr.mxu0 0.0
        %1408 = vmatpush1.msra.mxu0 0.0
        %1409 = vmatprep.subr.mxu0 0.0
        %1410 = vmatpush1.msra.mxu0 0.0
        %1411 = vmatprep.subr.mxu0 0.0
        %1412 = vmatpush1.msra.mxu0 0.0
        %1413 = vmatprep.subr.mxu0 0.0
        %1414 = vmatpush1.msra.mxu0 0.0
        %1415 = vmatprep.subr.mxu0 0.0
        %1416 = vmatpush1.msra.mxu0 0.0
        %1417 = vmatprep.subr.mxu0 0.0
        %1418 = vmatpush1.msra.mxu0 0.0
        %1419 = vmatprep.subr.mxu0 0.0
        %1420 = vmatpush1.msra.mxu0 0.0
        %1421 = vmatprep.subr.mxu0 0.0
        %1422 = vmatpush1.msra.mxu0 0.0
        %1423 = vmatprep.subr.mxu0 0.0
        %1424 = vmatpush1.msra.mxu0 0.0
        %1425 = vmatprep.subr.mxu0 0.0
        %1426 = vmatpush1.msra.mxu0 0.0
        %1427 = vmatprep.subr.mxu0 0.0
        %1428 = vmatpush1.msra.mxu0 0.0
        %1429 = vmatprep.subr.mxu0 0.0
        %1430 = vmatpush1.msra.mxu0 0.0
        %1431 = vmatprep.subr.mxu0 0.0
        %1432 = vmatpush1.msra.mxu0 0.0
        %1433 = vmatprep.subr.mxu0 0.0
        %1434 = vmatpush1.msra.mxu0 0.0
        %1435 = vmatprep.subr.mxu0 0.0
        %1436 = vmatpush1.msra.mxu0 0.0
        %1437 = vmatprep.subr.mxu0 0.0
        %1438 = vmatpush1.msra.mxu0 0.0
        %1439 = vmatprep.subr.mxu0 0.0
        %1440 = vmatpush1.msra.mxu0 0.0
        %1441 = vmatprep.subr.mxu0 0.0
        %1442 = vmatpush1.msra.mxu0 0.0
        %1443 = vmatprep.subr.mxu0 0.0
        %1444 = vmatpush1.msra.mxu0 0.0
        %1445 = vmatprep.subr.mxu0 0.0
        %1446 = vmatpush1.msra.mxu0 0.0
        %1447 = vmatprep.subr.mxu0 0.0
        %1448 = vmatpush1.msra.mxu0 0.0
        %1449 = vmatprep.subr.mxu0 0.0
        %1450 = vmatpush1.msra.mxu0 0.0
        %1451 = vmatprep.subr.mxu0 0.0
        %1452 = vmatpush1.msra.mxu0 0.0
        %1453 = vmatprep.subr.mxu0 0.0
        %1454 = vmatpush1.msra.mxu0 0.0
        %1455 = vmatprep.subr.mxu0 0.0
        %1456 = vmatpush1.msra.mxu0 0.0
        %1457 = vmatprep.mubr.f32.mxu0 0.0
        %1458 = vmatmul.mubr.f32.gmra.mrb[0].mxu0 %v1391
        %v1459 = vpop.f32.mrb[0].mxu0
        %v1460 = vadd.f32 %v1388, %v1459
        %v1461 = vpop.f32.mrb[0].mxu0
        %v1462 = vadd.f32 %v1388, %v1461
        %1463 = vdwg.mxu0
        %v1466 = vcombine.low %v1460, %v1462
        %1468 = vst [vmem:[%s424] sm:$0xff] %v1466
        %s1469 = sand.u32 %s254, 1
        %s1470 = scalar_lea.sflag [#allocation3], %s1469
        %s1471 = sand.u32 %s254, 1
        %s1472 = smul.addr %s1471, 8
        %s1473 = scalar_lea.vmem [#allocation2], %s1472
        // Predicated region
        $region53: #{tpu_custom_call.1} parent=51 // pred_check
          %p1474 = pneg %p264
        $region54: #{tpu_custom_call.1} parent=51 // pred_check_branch
          %1476 = sbr.rel (%p1474) target = $region56
        $region55: #{tpu_custom_call.1} parent=51 // pred_region
          %s1477 = smul.u32 2, %s27
          %s1479 = ssub.s32 128, 128
          %1480 = vsyncadd %s1470, %s1479
          %s1481 = smul.addr %s26, 2
          %s1482 = sadd.s32 %s1477, %s1481
          %s1483 = smul.addr %s1482, 64
          %s1484 = scalar_lea.hbm %s8, %s1483
          %s1486 = sshll.u32 %s1473, 4
          %s1487 = int_to_ptr.vmem [resolvable:$true] %s1486
          %1489 = dma.vmem_to_hbm [thread:$0]  %s1487, 128, %s1484, %s1470
        $region56: #{tpu_custom_call.1} parent=51 // pred_fallthru
          _
      $region52: #{tpu_custom_call.1} parent=5 // pred_fallthru
        _
      %p1490 = scmp.le.s32.totalorder 2, %s17
      // Predicated region
      $region57: #{tpu_custom_call.1} parent=5 // pred_check
        %p1491 = pneg %p1490
      $region58: #{tpu_custom_call.1} parent=5 // pred_check_branch
        %1493 = sbr.rel (%p1491) target = $region60
      $region59: #{tpu_custom_call.1} parent=5 // pred_region
        %s1494 = ssub.s32 %s17, 2
        // Predicated region
        $region61: #{tpu_custom_call.1} parent=59 // pred_check
          %p1495 = pneg %p270
        $region62: #{tpu_custom_call.1} parent=59 // pred_check_branch
          %1497 = sbr.rel (%p1495) target = $region64
        $region63: #{tpu_custom_call.1} parent=59 // pred_region
          %s1498 = sand.u32 %s255, 1
          %s1499 = scalar_lea.sflag [#allocation3], %s1498
          %s1500 = sand.u32 %s255, 1
          %s1501 = smul.addr %s1500, 8
          %s1502 = scalar_lea.vmem [#allocation2], %s1501
          %1503 = dma.done %s1499, 128
        $region64: #{tpu_custom_call.1} parent=59 // pred_fallthru
          _
      $region60: #{tpu_custom_call.1} parent=5 // pred_fallthru
        _
    $region6: #{tpu_custom_call.1} parent=1 // loop_footer
      %s21 = sadd.s32 1, %s17
    $region7: #{tpu_custom_call.1} parent=1 // loop_footer_branch
      %16 = sbr.rel target = $region3
    $region8: #{tpu_custom_call.1} parent=1 // loop_exit
      _
    %1504 = vsyncpa [#allocation3], 1
    %s1505 = scalar_lea.sflag [#allocation3], 1
    %1506 = vsyncpa %s1505, 1

</llo_original>
